<compile_context>
chip_gen: v7x
topology: tpu7x:2x2x1
jax: 0.10.0
libtpu: 0.0.40
codegen_flags: <defaults>
</compile_context>

<pallas_src>
import functools

import jax
import jax.numpy as jnp
from jax.experimental import pallas as pl
from jax.experimental.pallas import tpu as pltpu

# ----------------------------- model config -------------------------------- #
CHANNELS      = [[8], [8, 16]]   # channels[0][0] = stem out-channels, rest = ResBlocks
CONV_KERNELS  = [5, 3]
CONV_STRIDES  = [1, 1]
CONV_PADDING  = [2, 1]
POOL_PADDING  = [0, 0]
NUM_CLASSES   = 15
BN_EPS        = 1e-5

assert all(s == 1 for s in CONV_STRIDES)
assert all(p == 0 for p in POOL_PADDING)


def _ceil8(v):
    return -(-v // 8) * 8


# --------------------------- in-kernel helpers ------------------------------ #
def _conv_bn(a, im_ref, w, b, mask_ref, *, K, p, relu):
    """Conv1d(stride=1, padding=p) + folded-BN bias (+ ReLU) via one im2col matmul.

    a        : (C_in, W) activation (nb samples folded into the lane axis).
    im_ref   : (rows >= K*C_in, W) VMEM im2col scratch.
    w        : (C_out, rows) BN-folded weights (zero in padded columns).
    b        : (C_out, 1) BN-folded bias.
    mask_ref : (K, W) 0/1 lane masks (zero where a tap crosses a sample edge).
    """
    C_in, W = a.shape
    rows = im_ref.shape[0]

    # Zero only the padded rows (stem only); keeps 0 * garbage from making NaN.
    if K * C_in < rows:
        im_ref[K * C_in:, :] = jnp.zeros((rows - K * C_in, W), jnp.float32)

    for k in range(K):
        s = k - p                                  # tap shift
        if s == 0:
            vals = a                               # in-bounds everywhere
        else:
            # roll(x, shift)[j] = x[j - shift]  =>  shift = (-s) % W gives x[j + s];
            # the wrapped / cross-sample lanes are exactly the masked ones.
            vals = pltpu.roll(a, shift=(-s) % W, axis=1) * mask_ref[k:k + 1, :]
        im_ref[k * C_in:(k + 1) * C_in, :] = vals  # one full-width, unmasked store

    y = jnp.dot(w, im_ref[...], preferred_element_type=jnp.float32) + b
    return jnp.maximum(y, 0.0) if relu else y


def _maxpool4(y, sel_ref):
    """MaxPool1d(4,4): 3 lane rolls + max put the window max at lane 4q+3, then
    ONE precomputed 0/1 stride-4 down-select matmul keeps the result lane-dense."""
    m = y
    for s in (1, 2, 3):
        m = jnp.maximum(m, pltpu.roll(y, shift=s, axis=1))
    return jnp.dot(m, sel_ref[...], preferred_element_type=jnp.float32)


# --------------------------------- kernel ----------------------------------- #
def _cnnres_kernel(*refs, steps, n_masks, n_sels, n_scratch):
    """Fused CNNRes forward for one batch chunk; `steps` is a static program."""
    x_ref, wpack_ref, bpack_ref, wl_ref, lb_ref = refs[:5]
    rest = refs[5:]
    mask_refs = rest[:n_masks]
    sel_refs = rest[n_masks:n_masks + n_sels]
    avgt_ref = rest[n_masks + n_sels]
    o_ref = rest[n_masks + n_sels + 1]
    im_refs = rest[n_masks + n_sels + 2:]
    assert len(im_refs) == n_scratch

    a = x_ref[...]                       # (1, nb*L0): nb samples folded into lanes
    identity = None

    for step in steps:
        tag = step[0]
        if tag == "conv":
            (_, im_idx, K, p, relu, c_in, c_out, w_off, w_cols, b_off, m_idx) = step
            assert a.shape[0] == c_in
            w = wpack_ref[w_off:w_off + c_out, 0:w_cols]     # 8-aligned sublane slice
            b = bpack_ref[b_off:b_off + c_out, 0:1]
            a = _conv_bn(a, im_refs[im_idx], w, b, mask_refs[m_idx],
                         K=K, p=p, relu=relu)
        elif tag == "pool":
            a = _maxpool4(a, sel_refs[step[1]])
        elif tag == "res_begin":
            identity = a
        elif tag == "res_end":
            _, rep, c_out, s_off, t_off = step
            # torch identity.repeat(1, rep, 1) == sublane concat of `rep` copies.
            ident = identity if rep == 1 else jnp.concatenate([identity] * rep, axis=0)
            s3 = bpack_ref[s_off:s_off + c_out, 0:1]          # post-add BN affine
            b3 = bpack_ref[t_off:t_off + c_out, 0:1]
            a = jnp.maximum((a + ident) * s3 + b3, 0.0)
        elif tag == "head":
            # AdaptiveAvgPool1d(1) + Linear + Sigmoid, vectorized over the chunk:
            # featT[i, c] = mean_t a[c, i*Lf + t]   via one contraction.
            featT = jnp.einsum("iw,cw->ic", avgt_ref[...], a,
                               preferred_element_type=jnp.float32)   # (nb, C)
            logits = jnp.dot(featT, wl_ref[...],
                             preferred_element_type=jnp.float32) + lb_ref[...]
            o_ref[...] = (1.0 / (1.0 + jnp.exp(-logits))).astype(o_ref.dtype)


# ------------------------------ host wrappers -------------------------------- #
def _bn_scale_shift(bn):
    gamma, beta, mean, var = bn
    s = gamma / jnp.sqrt(var + BN_EPS)
    return s, beta - mean * s


def _fold_conv_bn(w, conv_b, bn):
    """Fold inference BatchNorm (+ conv bias) into im2col-ordered conv weights."""
    c_out, c_in, k = w.shape
    gamma, beta, mean, var = bn
    s = gamma / jnp.sqrt(var + BN_EPS)
    w2 = jnp.transpose(w, (0, 2, 1)).reshape(c_out, k * c_in)   # (k, ci) row order
    wf = (w2 * s[:, None]).astype(jnp.float32)
    bf = (s * (conv_b - mean) + beta)[:, None].astype(jnp.float32)
    return wf, bf


def _tap_mask(K, p, L, nb):
    """(K, nb*L) 0/1 masks: tap k valid where 0 <= (j mod L) + (k - p) < L."""
    jl = jnp.arange(nb * L) % L
    rows = [((jl + (k - p) >= 0) & (jl + (k - p) < L)) for k in range(K)]
    return jnp.stack(rows, axis=0).astype(jnp.float32)


def _pool_select(W):
    """(W, W//4) 0/1 matrix selecting lane 4q+3 (where the rolled window max lives)."""
    w = jnp.arange(W)[:, None]
    q = jnp.arange(W // 4)[None, :]
    return (w == 4 * q + 3).astype(jnp.float32)


def cnnres_forward(x, params):
    N, c_in0, L0 = x.shape
    assert c_in0 == 1
    assert L0 % 16 == 0                 # two MaxPool(4,4) stages
    f32 = jnp.float32

    # Batch chunking: nb samples folded into lanes per grid step.  Keep the
    # deepest activation lane-dense (>= 128 lanes) when the batch allows; large
    # batches then split across v7x's two TensorCores via the parallel grid axis.
    Lf = L0 // 16
    min_nb = max(1, -(-128 // Lf))
    nb = N
    if N > min_nb:
        for d in range(min_nb, N + 1):
            if N % d == 0:
                nb = d
                break
    G = N // nb

    # ------------- build static step program + packed params/constants -------- #
    steps, scratch = [], []
    w_blocks, b_blocks = [], []          # (row_offset, array) for vertical packing
    w_off = b_off = 0
    mask_arrs, mask_key = [], {}
    sel_arrs, sel_key = [], {}
    L = L0

    def add_mask(K, p, L_):
        key = (K, p, L_)
        if key not in mask_key:
            mask_key[key] = len(mask_arrs)
            mask_arrs.append(_tap_mask(K, p, L_, nb))
        return mask_key[key]

    def add_sel(W):
        if W not in sel_key:
            sel_key[W] = len(sel_arrs)
            sel_arrs.append(_pool_select(W))
        return sel_key[W]

    def add_conv(wb, bn, c_in, K, p, relu):
        nonlocal w_off, b_off
        w, cb = wb
        c_out = w.shape[0]
        wf, bf = _fold_conv_bn(w, cb, bn)
        cols = _ceil8(K * c_in)                           # pad contraction dim to 8
        wf = jnp.pad(wf, ((0, 0), (0, cols - K * c_in)))
        w_blocks.append((w_off, wf))
        b_blocks.append((b_off, bf))
        scratch.append(pltpu.VMEM((cols, nb * L), f32))   # per-conv im2col buffer
        steps.append(("conv", len(scratch) - 1, K, p, relu, c_in, c_out,
                      w_off, cols, b_off, add_mask(K, p, L)))
        w_off += _ceil8(c_out)
        b_off += _ceil8(c_out)
        return c_out

    # stem: Conv1d(1 -> C0) + BN + ReLU, then MaxPool4
    c = add_conv(params['conv0'], params['bn0'], 1,
                 CONV_KERNELS[0], CONV_PADDING[0], True)
    assert L % 4 == 0
    steps.append(("pool", add_sel(nb * L))); L //= 4

    # residual stages
    for i, stage in enumerate(params['res']):
        K, p = CONV_KERNELS[i + 1], CONV_PADDING[i + 1]
        for blk in stage:
            steps.append(("res_begin",))
            c_in = c
            c = add_conv(blk['conv1'], blk['bn1'], c_in, K, p, True)
            c = add_conv(blk['conv2'], blk['bn2'], c, K, p, False)
            if c < c_in or c % c_in != 0:
                raise RuntimeError(
                    'Dims in ResBlock needs to be divisible on the previous dims!!')
            s3, t3 = _bn_scale_shift(blk['bn3'])
            b_blocks.append((b_off, s3[:, None].astype(f32))); s_off_ = b_off
            b_off += _ceil8(c)
            b_blocks.append((b_off, t3[:, None].astype(f32))); t_off_ = b_off
            b_off += _ceil8(c)
            steps.append(("res_end", c // c_in, c, s_off_, t_off_))
        if i < len(POOL_PADDING) - 1:
            assert L % 4 == 0
            steps.append(("pool", add_sel(nb * L))); L //= 4

    steps.append(("head",))
    assert L == Lf

    # ---- pack weights (8-aligned row offsets) and (C,1) bias/scale vectors ---- #
    wpack = jnp.zeros((max(w_off, 8), max(blk.shape[1] for _, blk in w_blocks)), f32)
    for off, blk in w_blocks:
        wpack = wpack.at[off:off + blk.shape[0], :blk.shape[1]].set(blk)
    bpack = jnp.zeros((max(b_off, 8), 1), f32)
    for off, vec in b_blocks:
        bpack = bpack.at[off:off + vec.shape[0], :].set(vec)

    wl = params['lin_wt'].astype(f32)            # (C_final, NUM_CLASSES)
    lb = params['lin_b'].astype(f32)             # (1, NUM_CLASSES)

    # (nb, nb*Lf) averaging matrix for the head (exact 1/Lf entries).
    i_ = jnp.arange(nb)[:, None]
    w_ = jnp.arange(nb * Lf)[None, :]
    avgt = ((w_ // Lf) == i_).astype(f32) / float(Lf)

    # (G, nb*L0): nb consecutive samples folded into the lane axis per row.
    x2 = x.reshape(N, L0).astype(f32).reshape(G, nb * L0)

    flat_inputs = [x2, wpack, bpack, wl, lb] + mask_arrs + sel_arrs + [avgt]

    def const_spec(arr):
        nd = arr.ndim
        return pl.BlockSpec(arr.shape, lambda g, _nd=nd: (0,) * _nd)

    in_specs = [pl.BlockSpec((1, nb * L0), lambda g: (g, 0))]
    in_specs += [const_spec(a) for a in flat_inputs[1:]]
    out_specs = pl.BlockSpec((nb, NUM_CLASSES), lambda g: (g, 0))

    kern = functools.partial(_cnnres_kernel, steps=tuple(steps),
                             n_masks=len(mask_arrs), n_sels=len(sel_arrs),
                             n_scratch=len(scratch))

    return pl.pallas_call(
        kern,
        out_shape=jax.ShapeDtypeStruct((N, NUM_CLASSES), f32),
        grid_spec=pltpu.PrefetchScalarGridSpec(
            num_scalar_prefetch=0, grid=(G,),
            in_specs=in_specs, out_specs=out_specs,
            scratch_shapes=scratch),
        compiler_params=pltpu.CompilerParams(
            dimension_semantics=("parallel",)),
    )(*flat_inputs)


# ----------------------- pure-JAX reference (for checking) ------------------- #
def _reference_forward(x, params):
    hp = jax.lax.Precision.HIGHEST

    def bn(h, bnp):
        gamma, beta, mean, var = bnp
        s = gamma / jnp.sqrt(var + BN_EPS)
        return h * s[None, :, None] + (beta - mean * s)[None, :, None]

    def conv(h, w, b, pad):
        y = jax.lax.conv_general_dilated(
            h, w, window_strides=(1,), padding=[(pad, pad)],
            dimension_numbers=('NCH', 'OIH', 'NCH'), precision=hp)
        return y + b[None, :, None]

    def pool4(h):
        n, c, l = h.shape
        return jnp.max(h.reshape(n, c, l // 4, 4), axis=-1)

    h = jax.nn.relu(bn(conv(x, *params['conv0'], CONV_PADDING[0]), params['bn0']))
    h = pool4(h)
    for i, stage in enumerate(params['res']):
        for blk in stage:
            ident = h
            t = jax.nn.relu(bn(conv(h, *blk['conv1'], CONV_PADDING[i + 1]), blk['bn1']))
            t = bn(conv(t, *blk['conv2'], CONV_PADDING[i + 1]), blk['bn2'])
            r = t.shape[1] // ident.shape[1]
            if r > 1:
                ident = jnp.tile(ident, (1, r, 1))
            h = jax.nn.relu(bn(t + ident, blk['bn3']))
        if i < len(POOL_PADDING) - 1:
            h = pool4(h)
    feat = jnp.mean(h, axis=-1)
    logits = jnp.dot(feat, params['lin_wt'], precision=hp) + params['lin_b']
    return jax.nn.sigmoid(logits)


# --------------------------- deterministic init ----------------------------- #
def _init_conv(key, c_out, c_in, k):
    k1, k2 = jax.random.split(key)
    bound = 1.0 / (c_in * k) ** 0.5
    w = jax.random.uniform(k1, (c_out, c_in, k), minval=-bound, maxval=bound)
    b = jax.random.uniform(k2, (c_out,), minval=-bound, maxval=bound)
    return w.astype(jnp.float32), b.astype(jnp.float32)


def _init_bn(key, c):
    k1, k2, k3, k4 = jax.random.split(key, 4)
    gamma = jax.random.uniform(k1, (c,), minval=0.5, maxval=1.5)
    beta = jax.random.uniform(k2, (c,), minval=-0.1, maxval=0.1)
    mean = jax.random.uniform(k3, (c,), minval=-0.1, maxval=0.1)
    var = jax.random.uniform(k4, (c,), minval=0.5, maxval=1.5)
    return tuple(a.astype(jnp.float32) for a in (gamma, beta, mean, var))


def init_params(key):
    keys = iter(jax.random.split(key, 64))
    params = {}
    params['conv0'] = _init_conv(next(keys), CHANNELS[0][0], 1, CONV_KERNELS[0])
    params['bn0'] = _init_bn(next(keys), CHANNELS[0][0])
    prev = CHANNELS[0][0]
    res = []
    for i in range(1, len(CHANNELS)):
        stage = []
        for c in CHANNELS[i]:
            blk = {
                'conv1': _init_conv(next(keys), c, prev, CONV_KERNELS[i]),
                'bn1': _init_bn(next(keys), c),
                'conv2': _init_conv(next(keys), c, c, CONV_KERNELS[i]),
                'bn2': _init_bn(next(keys), c),
                'bn3': _init_bn(next(keys), c),
            }
            stage.append(blk)
            prev = c
        res.append(stage)
    params['res'] = res
    lk1, lk2 = jax.random.split(next(keys))
    bound = 1.0 / prev ** 0.5
    params['lin_wt'] = jax.random.uniform(
        lk1, (prev, NUM_CLASSES), minval=-bound, maxval=bound).astype(jnp.float32)
    params['lin_b'] = jax.random.uniform(
        lk2, (1, NUM_CLASSES), minval=-bound, maxval=bound).astype(jnp.float32)
    return params


# ---------------------------------- main ------------------------------------ #
if __name__ == "__main__":
    key = jax.random.PRNGKey(0)
    pkey, xkey = jax.random.split(key)
    params = init_params(pkey)
    inwav = jax.random.normal(xkey, (2, 1, 256), dtype=jnp.float32)   # (N, C=1, L)

    out = jax.block_until_ready(cnnres_forward(inwav, params))
    assert out.shape == (2, NUM_CLASSES)
    assert bool(jnp.all(jnp.isfinite(out)))

    ref = jax.block_until_ready(_reference_forward(inwav, params))
    err = float(jnp.max(jnp.abs(out - ref)))
    assert err < 2e-2, f"kernel/reference mismatch: max abs err {err}"
    print("KERNEL_OK")
</pallas_src>

<mosaic_0001>
module attributes {stable_mosaic.version = 11 : i64} {
  func.func @_cnnres_kernel(%arg0: i32, %arg1: memref<1x512xf32, #tpu.memory_space<vmem>>, %arg2: memref<56x48xf32, #tpu.memory_space<vmem>>, %arg3: memref<104x1xf32, #tpu.memory_space<vmem>>, %arg4: memref<16x15xf32, #tpu.memory_space<vmem>>, %arg5: memref<1x15xf32, #tpu.memory_space<vmem>>, %arg6: memref<5x512xf32, #tpu.memory_space<vmem>>, %arg7: memref<3x128xf32, #tpu.memory_space<vmem>>, %arg8: memref<512x128xf32, #tpu.memory_space<vmem>>, %arg9: memref<128x32xf32, #tpu.memory_space<vmem>>, %arg10: memref<2x32xf32, #tpu.memory_space<vmem>>, %arg11: memref<2x15xf32, #tpu.memory_space<vmem>>, %arg12: memref<8x512xf32, #tpu.memory_space<vmem>>, %arg13: memref<24x128xf32, #tpu.memory_space<vmem>>, %arg14: memref<24x128xf32, #tpu.memory_space<vmem>>, %arg15: memref<24x128xf32, #tpu.memory_space<vmem>>, %arg16: memref<48x128xf32, #tpu.memory_space<vmem>>) attributes {dimension_semantics = [#tpu.dimension_semantics<parallel>], iteration_bounds = array<i64: 1>, scalar_prefetch = 0 : i64, scratch_operands = 5 : i64, tpu.core_type = #tpu.core_type<tc>, window_params = [{transform_indices = @transform_0, window_bounds = array<i64: 1, 512>}, {pipeline_mode = #tpu.pipeline_mode<synchronous>, transform_indices = @transform_1, window_bounds = array<i64: 56, 48>}, {pipeline_mode = #tpu.pipeline_mode<synchronous>, transform_indices = @transform_2, window_bounds = array<i64: 104, 1>}, {pipeline_mode = #tpu.pipeline_mode<synchronous>, transform_indices = @transform_3, window_bounds = array<i64: 16, 15>}, {pipeline_mode = #tpu.pipeline_mode<synchronous>, transform_indices = @transform_4, window_bounds = array<i64: 1, 15>}, {pipeline_mode = #tpu.pipeline_mode<synchronous>, transform_indices = @transform_5, window_bounds = array<i64: 5, 512>}, {pipeline_mode = #tpu.pipeline_mode<synchronous>, transform_indices = @transform_6, window_bounds = array<i64: 3, 128>}, {pipeline_mode = #tpu.pipeline_mode<synchronous>, transform_indices = @transform_7, window_bounds = array<i64: 512, 128>}, {pipeline_mode = #tpu.pipeline_mode<synchronous>, transform_indices = @transform_8, window_bounds = array<i64: 128, 32>}, {pipeline_mode = #tpu.pipeline_mode<synchronous>, transform_indices = @transform_9, window_bounds = array<i64: 2, 32>}, {transform_indices = @transform_10, window_bounds = array<i64: 2, 15>}]} {
    %c0 = arith.constant 0 : index
    %c0_0 = arith.constant 0 : index
    %0 = vector.load %arg1[%c0, %c0_0] : memref<1x512xf32, #tpu.memory_space<vmem>>, vector<1x512xf32>
    %c0_1 = arith.constant 0 : index
    %c0_2 = arith.constant 0 : index
    %1 = vector.load %arg2[%c0_1, %c0_2] : memref<56x48xf32, #tpu.memory_space<vmem>>, vector<8x8xf32>
    %c0_3 = arith.constant 0 : index
    %c0_4 = arith.constant 0 : index
    %2 = vector.load %arg3[%c0_3, %c0_4] : memref<104x1xf32, #tpu.memory_space<vmem>>, vector<8x1xf32>
    %cst = arith.constant 0.000000e+00 : f32
    %3 = vector.broadcast %cst : f32 to vector<3x512xf32>
    %c5 = arith.constant 5 : index
    %c0_5 = arith.constant 0 : index
    %4 = vector.load %arg12[%c5, %c0_5] : memref<8x512xf32, #tpu.memory_space<vmem>>, vector<3x512xf32>
    tpu.vector_store %arg12[%c5, %c0_5], %3 {strides = array<i32>} : memref<8x512xf32, #tpu.memory_space<vmem>>, vector<3x512xf32>,
    %c2_i32 = arith.constant 2 : i32
    %5 = tpu.dynamic_rotate %0 by %c2_i32 dim 1 : vector<1x512xf32>, i32 -> vector<1x512xf32>
    %c0_6 = arith.constant 0 : index
    %c0_7 = arith.constant 0 : index
    %6 = vector.load %arg6[%c0_6, %c0_7] : memref<5x512xf32, #tpu.memory_space<vmem>>, vector<1x512xf32>
    %7 = arith.mulf %5, %6 : vector<1x512xf32>
    %c0_8 = arith.constant 0 : index
    %c0_9 = arith.constant 0 : index
    %8 = vector.load %arg12[%c0_8, %c0_9] : memref<8x512xf32, #tpu.memory_space<vmem>>, vector<1x512xf32>
    tpu.vector_store %arg12[%c0_8, %c0_9], %7 {strides = array<i32>} : memref<8x512xf32, #tpu.memory_space<vmem>>, vector<1x512xf32>,
    %c1_i32 = arith.constant 1 : i32
    %9 = tpu.dynamic_rotate %0 by %c1_i32 dim 1 : vector<1x512xf32>, i32 -> vector<1x512xf32>
    %c1 = arith.constant 1 : index
    %c0_10 = arith.constant 0 : index
    %10 = vector.load %arg6[%c1, %c0_10] : memref<5x512xf32, #tpu.memory_space<vmem>>, vector<1x512xf32>
    %11 = arith.mulf %9, %10 : vector<1x512xf32>
    %c1_11 = arith.constant 1 : index
    %c0_12 = arith.constant 0 : index
    %12 = vector.load %arg12[%c1_11, %c0_12] : memref<8x512xf32, #tpu.memory_space<vmem>>, vector<1x512xf32>
    tpu.vector_store %arg12[%c1_11, %c0_12], %11 {strides = array<i32>} : memref<8x512xf32, #tpu.memory_space<vmem>>, vector<1x512xf32>,
    %c2 = arith.constant 2 : index
    %c0_13 = arith.constant 0 : index
    %13 = vector.load %arg12[%c2, %c0_13] : memref<8x512xf32, #tpu.memory_space<vmem>>, vector<1x512xf32>
    tpu.vector_store %arg12[%c2, %c0_13], %0 {strides = array<i32>} : memref<8x512xf32, #tpu.memory_space<vmem>>, vector<1x512xf32>,
    %c511_i32 = arith.constant 511 : i32
    %14 = tpu.dynamic_rotate %0 by %c511_i32 dim 1 : vector<1x512xf32>, i32 -> vector<1x512xf32>
    %c3 = arith.constant 3 : index
    %c0_14 = arith.constant 0 : index
    %15 = vector.load %arg6[%c3, %c0_14] : memref<5x512xf32, #tpu.memory_space<vmem>>, vector<1x512xf32>
    %16 = arith.mulf %14, %15 : vector<1x512xf32>
    %c3_15 = arith.constant 3 : index
    %c0_16 = arith.constant 0 : index
    %17 = vector.load %arg12[%c3_15, %c0_16] : memref<8x512xf32, #tpu.memory_space<vmem>>, vector<1x512xf32>
    tpu.vector_store %arg12[%c3_15, %c0_16], %16 {strides = array<i32>} : memref<8x512xf32, #tpu.memory_space<vmem>>, vector<1x512xf32>,
    %c510_i32 = arith.constant 510 : i32
    %18 = tpu.dynamic_rotate %0 by %c510_i32 dim 1 : vector<1x512xf32>, i32 -> vector<1x512xf32>
    %c4 = arith.constant 4 : index
    %c0_17 = arith.constant 0 : index
    %19 = vector.load %arg6[%c4, %c0_17] : memref<5x512xf32, #tpu.memory_space<vmem>>, vector<1x512xf32>
    %20 = arith.mulf %18, %19 : vector<1x512xf32>
    %c4_18 = arith.constant 4 : index
    %c0_19 = arith.constant 0 : index
    %21 = vector.load %arg12[%c4_18, %c0_19] : memref<8x512xf32, #tpu.memory_space<vmem>>, vector<1x512xf32>
    tpu.vector_store %arg12[%c4_18, %c0_19], %20 {strides = array<i32>} : memref<8x512xf32, #tpu.memory_space<vmem>>, vector<1x512xf32>,
    %c0_20 = arith.constant 0 : index
    %c0_21 = arith.constant 0 : index
    %22 = vector.load %arg12[%c0_20, %c0_21] : memref<8x512xf32, #tpu.memory_space<vmem>>, vector<8x512xf32>
    %cst_22 = arith.constant dense<0.000000e+00> : vector<8x512xf32>
    %23 = tpu.matmul %1, %22, %cst_22 {dimension_numbers = #tpu.dot_dimension_numbers<[1], [0], [0], [1], [0, 0, 1, 1], [], []>} : vector<8x8xf32>, vector<8x512xf32>, vector<8x512xf32> -> vector<8x512xf32>
    %24 = vector.broadcast %2 : vector<8x1xf32> to vector<8x512xf32>
    %25 = arith.addf %23, %24 : vector<8x512xf32>
    %cst_23 = arith.constant 0.000000e+00 : f32
    %26 = vector.broadcast %cst_23 : f32 to vector<8x512xf32>
    %27 = arith.maximumf %25, %26 : vector<8x512xf32>
    %c1_i32_24 = arith.constant 1 : i32
    %28 = tpu.dynamic_rotate %27 by %c1_i32_24 dim 1 : vector<8x512xf32>, i32 -> vector<8x512xf32>
    %29 = arith.maximumf %27, %28 : vector<8x512xf32>
    %c2_i32_25 = arith.constant 2 : i32
    %30 = tpu.dynamic_rotate %27 by %c2_i32_25 dim 1 : vector<8x512xf32>, i32 -> vector<8x512xf32>
    %31 = arith.maximumf %29, %30 : vector<8x512xf32>
    %c3_i32 = arith.constant 3 : i32
    %32 = tpu.dynamic_rotate %27 by %c3_i32 dim 1 : vector<8x512xf32>, i32 -> vector<8x512xf32>
    %33 = arith.maximumf %31, %32 : vector<8x512xf32>
    %c0_26 = arith.constant 0 : index
    %c0_27 = arith.constant 0 : index
    %34 = vector.load %arg8[%c0_26, %c0_27] : memref<512x128xf32, #tpu.memory_space<vmem>>, vector<512x128xf32>
    %cst_28 = arith.constant dense<0.000000e+00> : vector<8x128xf32>
    %35 = tpu.matmul %33, %34, %cst_28 {dimension_numbers = #tpu.dot_dimension_numbers<[1], [0], [0], [1], [0, 0, 1, 1], [], []>} : vector<8x512xf32>, vector<512x128xf32>, vector<8x128xf32> -> vector<8x128xf32>
    %c8 = arith.constant 8 : index
    %c0_29 = arith.constant 0 : index
    %36 = vector.load %arg2[%c8, %c0_29] : memref<56x48xf32, #tpu.memory_space<vmem>>, vector<8x24xf32>
    %c8_30 = arith.constant 8 : index
    %c0_31 = arith.constant 0 : index
    %37 = vector.load %arg3[%c8_30, %c0_31] : memref<104x1xf32, #tpu.memory_space<vmem>>, vector<8x1xf32>
    %c1_i32_32 = arith.constant 1 : i32
    %38 = tpu.dynamic_rotate %35 by %c1_i32_32 dim 1 : vector<8x128xf32>, i32 -> vector<8x128xf32>
    %c0_33 = arith.constant 0 : index
    %c0_34 = arith.constant 0 : index
    %39 = vector.load %arg7[%c0_33, %c0_34] : memref<3x128xf32, #tpu.memory_space<vmem>>, vector<1x128xf32>
    %40 = vector.broadcast %39 : vector<1x128xf32> to vector<8x128xf32>
    %41 = arith.mulf %38, %40 : vector<8x128xf32>
    %c0_35 = arith.constant 0 : index
    %c0_36 = arith.constant 0 : index
    %42 = vector.load %arg13[%c0_35, %c0_36] : memref<24x128xf32, #tpu.memory_space<vmem>>, vector<8x128xf32>
    tpu.vector_store %arg13[%c0_35, %c0_36], %41 {strides = array<i32>} : memref<24x128xf32, #tpu.memory_space<vmem>>, vector<8x128xf32>,
    %c8_37 = arith.constant 8 : index
    %c0_38 = arith.constant 0 : index
    %43 = vector.load %arg13[%c8_37, %c0_38] : memref<24x128xf32, #tpu.memory_space<vmem>>, vector<8x128xf32>
    tpu.vector_store %arg13[%c8_37, %c0_38], %35 {strides = array<i32>} : memref<24x128xf32, #tpu.memory_space<vmem>>, vector<8x128xf32>,
    %c127_i32 = arith.constant 127 : i32
    %44 = tpu.dynamic_rotate %35 by %c127_i32 dim 1 : vector<8x128xf32>, i32 -> vector<8x128xf32>
    %c2_39 = arith.constant 2 : index
    %c0_40 = arith.constant 0 : index
    %45 = vector.load %arg7[%c2_39, %c0_40] : memref<3x128xf32, #tpu.memory_space<vmem>>, vector<1x128xf32>
    %46 = vector.broadcast %45 : vector<1x128xf32> to vector<8x128xf32>
    %47 = arith.mulf %44, %46 : vector<8x128xf32>
    %c16 = arith.constant 16 : index
    %c0_41 = arith.constant 0 : index
    %48 = vector.load %arg13[%c16, %c0_41] : memref<24x128xf32, #tpu.memory_space<vmem>>, vector<8x128xf32>
    tpu.vector_store %arg13[%c16, %c0_41], %47 {strides = array<i32>} : memref<24x128xf32, #tpu.memory_space<vmem>>, vector<8x128xf32>,
    %c0_42 = arith.constant 0 : index
    %c0_43 = arith.constant 0 : index
    %49 = vector.load %arg13[%c0_42, %c0_43] : memref<24x128xf32, #tpu.memory_space<vmem>>, vector<24x128xf32>
    %cst_44 = arith.constant dense<0.000000e+00> : vector<8x128xf32>
    %50 = tpu.matmul %36, %49, %cst_44 {dimension_numbers = #tpu.dot_dimension_numbers<[1], [0], [0], [1], [0, 0, 1, 1], [], []>} : vector<8x24xf32>, vector<24x128xf32>, vector<8x128xf32> -> vector<8x128xf32>
    %51 = vector.broadcast %37 : vector<8x1xf32> to vector<8x128xf32>
    %52 = arith.addf %50, %51 : vector<8x128xf32>
    %cst_45 = arith.constant 0.000000e+00 : f32
    %53 = vector.broadcast %cst_45 : f32 to vector<8x128xf32>
    %54 = arith.maximumf %52, %53 : vector<8x128xf32>
    %c16_46 = arith.constant 16 : index
    %c0_47 = arith.constant 0 : index
    %55 = vector.load %arg2[%c16_46, %c0_47] : memref<56x48xf32, #tpu.memory_space<vmem>>, vector<8x24xf32>
    %c16_48 = arith.constant 16 : index
    %c0_49 = arith.constant 0 : index
    %56 = vector.load %arg3[%c16_48, %c0_49] : memref<104x1xf32, #tpu.memory_space<vmem>>, vector<8x1xf32>
    %c1_i32_50 = arith.constant 1 : i32
    %57 = tpu.dynamic_rotate %54 by %c1_i32_50 dim 1 : vector<8x128xf32>, i32 -> vector<8x128xf32>
    %c0_51 = arith.constant 0 : index
    %c0_52 = arith.constant 0 : index
    %58 = vector.load %arg7[%c0_51, %c0_52] : memref<3x128xf32, #tpu.memory_space<vmem>>, vector<1x128xf32>
    %59 = vector.broadcast %58 : vector<1x128xf32> to vector<8x128xf32>
    %60 = arith.mulf %57, %59 : vector<8x128xf32>
    %c0_53 = arith.constant 0 : index
    %c0_54 = arith.constant 0 : index
    %61 = vector.load %arg14[%c0_53, %c0_54] : memref<24x128xf32, #tpu.memory_space<vmem>>, vector<8x128xf32>
    tpu.vector_store %arg14[%c0_53, %c0_54], %60 {strides = array<i32>} : memref<24x128xf32, #tpu.memory_space<vmem>>, vector<8x128xf32>,
    %c8_55 = arith.constant 8 : index
    %c0_56 = arith.constant 0 : index
    %62 = vector.load %arg14[%c8_55, %c0_56] : memref<24x128xf32, #tpu.memory_space<vmem>>, vector<8x128xf32>
    tpu.vector_store %arg14[%c8_55, %c0_56], %54 {strides = array<i32>} : memref<24x128xf32, #tpu.memory_space<vmem>>, vector<8x128xf32>,
    %c127_i32_57 = arith.constant 127 : i32
    %63 = tpu.dynamic_rotate %54 by %c127_i32_57 dim 1 : vector<8x128xf32>, i32 -> vector<8x128xf32>
    %c2_58 = arith.constant 2 : index
    %c0_59 = arith.constant 0 : index
    %64 = vector.load %arg7[%c2_58, %c0_59] : memref<3x128xf32, #tpu.memory_space<vmem>>, vector<1x128xf32>
    %65 = vector.broadcast %64 : vector<1x128xf32> to vector<8x128xf32>
    %66 = arith.mulf %63, %65 : vector<8x128xf32>
    %c16_60 = arith.constant 16 : index
    %c0_61 = arith.constant 0 : index
    %67 = vector.load %arg14[%c16_60, %c0_61] : memref<24x128xf32, #tpu.memory_space<vmem>>, vector<8x128xf32>
    tpu.vector_store %arg14[%c16_60, %c0_61], %66 {strides = array<i32>} : memref<24x128xf32, #tpu.memory_space<vmem>>, vector<8x128xf32>,
    %c0_62 = arith.constant 0 : index
    %c0_63 = arith.constant 0 : index
    %68 = vector.load %arg14[%c0_62, %c0_63] : memref<24x128xf32, #tpu.memory_space<vmem>>, vector<24x128xf32>
    %cst_64 = arith.constant dense<0.000000e+00> : vector<8x128xf32>
    %69 = tpu.matmul %55, %68, %cst_64 {dimension_numbers = #tpu.dot_dimension_numbers<[1], [0], [0], [1], [0, 0, 1, 1], [], []>} : vector<8x24xf32>, vector<24x128xf32>, vector<8x128xf32> -> vector<8x128xf32>
    %70 = vector.broadcast %56 : vector<8x1xf32> to vector<8x128xf32>
    %71 = arith.addf %69, %70 : vector<8x128xf32>
    %c24 = arith.constant 24 : index
    %c0_65 = arith.constant 0 : index
    %72 = vector.load %arg3[%c24, %c0_65] : memref<104x1xf32, #tpu.memory_space<vmem>>, vector<8x1xf32>
    %c32 = arith.constant 32 : index
    %c0_66 = arith.constant 0 : index
    %73 = vector.load %arg3[%c32, %c0_66] : memref<104x1xf32, #tpu.memory_space<vmem>>, vector<8x1xf32>
    %74 = arith.addf %71, %35 : vector<8x128xf32>
    %75 = vector.broadcast %72 : vector<8x1xf32> to vector<8x128xf32>
    %76 = arith.mulf %74, %75 : vector<8x128xf32>
    %77 = vector.broadcast %73 : vector<8x1xf32> to vector<8x128xf32>
    %78 = arith.addf %76, %77 : vector<8x128xf32>
    %cst_67 = arith.constant 0.000000e+00 : f32
    %79 = vector.broadcast %cst_67 : f32 to vector<8x128xf32>
    %80 = arith.maximumf %78, %79 : vector<8x128xf32>
    %c24_68 = arith.constant 24 : index
    %c0_69 = arith.constant 0 : index
    %81 = vector.load %arg2[%c24_68, %c0_69] : memref<56x48xf32, #tpu.memory_space<vmem>>, vector<16x24xf32>
    %c40 = arith.constant 40 : index
    %c0_70 = arith.constant 0 : index
    %82 = vector.load %arg3[%c40, %c0_70] : memref<104x1xf32, #tpu.memory_space<vmem>>, vector<16x1xf32>
    %c1_i32_71 = arith.constant 1 : i32
    %83 = tpu.dynamic_rotate %80 by %c1_i32_71 dim 1 : vector<8x128xf32>, i32 -> vector<8x128xf32>
    %c0_72 = arith.constant 0 : index
    %c0_73 = arith.constant 0 : index
    %84 = vector.load %arg7[%c0_72, %c0_73] : memref<3x128xf32, #tpu.memory_space<vmem>>, vector<1x128xf32>
    %85 = vector.broadcast %84 : vector<1x128xf32> to vector<8x128xf32>
    %86 = arith.mulf %83, %85 : vector<8x128xf32>
    %c0_74 = arith.constant 0 : index
    %c0_75 = arith.constant 0 : index
    %87 = vector.load %arg15[%c0_74, %c0_75] : memref<24x128xf32, #tpu.memory_space<vmem>>, vector<8x128xf32>
    tpu.vector_store %arg15[%c0_74, %c0_75], %86 {strides = array<i32>} : memref<24x128xf32, #tpu.memory_space<vmem>>, vector<8x128xf32>,
    %c8_76 = arith.constant 8 : index
    %c0_77 = arith.constant 0 : index
    %88 = vector.load %arg15[%c8_76, %c0_77] : memref<24x128xf32, #tpu.memory_space<vmem>>, vector<8x128xf32>
    tpu.vector_store %arg15[%c8_76, %c0_77], %80 {strides = array<i32>} : memref<24x128xf32, #tpu.memory_space<vmem>>, vector<8x128xf32>,
    %c127_i32_78 = arith.constant 127 : i32
    %89 = tpu.dynamic_rotate %80 by %c127_i32_78 dim 1 : vector<8x128xf32>, i32 -> vector<8x128xf32>
    %c2_79 = arith.constant 2 : index
    %c0_80 = arith.constant 0 : index
    %90 = vector.load %arg7[%c2_79, %c0_80] : memref<3x128xf32, #tpu.memory_space<vmem>>, vector<1x128xf32>
    %91 = vector.broadcast %90 : vector<1x128xf32> to vector<8x128xf32>
    %92 = arith.mulf %89, %91 : vector<8x128xf32>
    %c16_81 = arith.constant 16 : index
    %c0_82 = arith.constant 0 : index
    %93 = vector.load %arg15[%c16_81, %c0_82] : memref<24x128xf32, #tpu.memory_space<vmem>>, vector<8x128xf32>
    tpu.vector_store %arg15[%c16_81, %c0_82], %92 {strides = array<i32>} : memref<24x128xf32, #tpu.memory_space<vmem>>, vector<8x128xf32>,
    %c0_83 = arith.constant 0 : index
    %c0_84 = arith.constant 0 : index
    %94 = vector.load %arg15[%c0_83, %c0_84] : memref<24x128xf32, #tpu.memory_space<vmem>>, vector<24x128xf32>
    %cst_85 = arith.constant dense<0.000000e+00> : vector<16x128xf32>
    %95 = tpu.matmul %81, %94, %cst_85 {dimension_numbers = #tpu.dot_dimension_numbers<[1], [0], [0], [1], [0, 0, 1, 1], [], []>} : vector<16x24xf32>, vector<24x128xf32>, vector<16x128xf32> -> vector<16x128xf32>
    %96 = vector.broadcast %82 : vector<16x1xf32> to vector<16x128xf32>
    %97 = arith.addf %95, %96 : vector<16x128xf32>
    %cst_86 = arith.constant 0.000000e+00 : f32
    %98 = vector.broadcast %cst_86 : f32 to vector<16x128xf32>
    %99 = arith.maximumf %97, %98 : vector<16x128xf32>
    %c40_87 = arith.constant 40 : index
    %c0_88 = arith.constant 0 : index
    %100 = vector.load %arg2[%c40_87, %c0_88] : memref<56x48xf32, #tpu.memory_space<vmem>>, vector<16x48xf32>
    %c56 = arith.constant 56 : index
    %c0_89 = arith.constant 0 : index
    %101 = vector.load %arg3[%c56, %c0_89] : memref<104x1xf32, #tpu.memory_space<vmem>>, vector<16x1xf32>
    %c1_i32_90 = arith.constant 1 : i32
    %102 = tpu.dynamic_rotate %99 by %c1_i32_90 dim 1 : vector<16x128xf32>, i32 -> vector<16x128xf32>
    %c0_91 = arith.constant 0 : index
    %c0_92 = arith.constant 0 : index
    %103 = vector.load %arg7[%c0_91, %c0_92] : memref<3x128xf32, #tpu.memory_space<vmem>>, vector<1x128xf32>
    %104 = vector.broadcast %103 : vector<1x128xf32> to vector<16x128xf32>
    %105 = arith.mulf %102, %104 : vector<16x128xf32>
    %c0_93 = arith.constant 0 : index
    %c0_94 = arith.constant 0 : index
    %106 = vector.load %arg16[%c0_93, %c0_94] : memref<48x128xf32, #tpu.memory_space<vmem>>, vector<16x128xf32>
    tpu.vector_store %arg16[%c0_93, %c0_94], %105 {strides = array<i32>} : memref<48x128xf32, #tpu.memory_space<vmem>>, vector<16x128xf32>,
    %c16_95 = arith.constant 16 : index
    %c0_96 = arith.constant 0 : index
    %107 = vector.load %arg16[%c16_95, %c0_96] : memref<48x128xf32, #tpu.memory_space<vmem>>, vector<16x128xf32>
    tpu.vector_store %arg16[%c16_95, %c0_96], %99 {strides = array<i32>} : memref<48x128xf32, #tpu.memory_space<vmem>>, vector<16x128xf32>,
    %c127_i32_97 = arith.constant 127 : i32
    %108 = tpu.dynamic_rotate %99 by %c127_i32_97 dim 1 : vector<16x128xf32>, i32 -> vector<16x128xf32>
    %c2_98 = arith.constant 2 : index
    %c0_99 = arith.constant 0 : index
    %109 = vector.load %arg7[%c2_98, %c0_99] : memref<3x128xf32, #tpu.memory_space<vmem>>, vector<1x128xf32>
    %110 = vector.broadcast %109 : vector<1x128xf32> to vector<16x128xf32>
    %111 = arith.mulf %108, %110 : vector<16x128xf32>
    %c32_100 = arith.constant 32 : index
    %c0_101 = arith.constant 0 : index
    %112 = vector.load %arg16[%c32_100, %c0_101] : memref<48x128xf32, #tpu.memory_space<vmem>>, vector<16x128xf32>
    tpu.vector_store %arg16[%c32_100, %c0_101], %111 {strides = array<i32>} : memref<48x128xf32, #tpu.memory_space<vmem>>, vector<16x128xf32>,
    %c0_102 = arith.constant 0 : index
    %c0_103 = arith.constant 0 : index
    %113 = vector.load %arg16[%c0_102, %c0_103] : memref<48x128xf32, #tpu.memory_space<vmem>>, vector<48x128xf32>
    %cst_104 = arith.constant dense<0.000000e+00> : vector<16x128xf32>
    %114 = tpu.matmul %100, %113, %cst_104 {dimension_numbers = #tpu.dot_dimension_numbers<[1], [0], [0], [1], [0, 0, 1, 1], [], []>} : vector<16x48xf32>, vector<48x128xf32>, vector<16x128xf32> -> vector<16x128xf32>
    %115 = vector.broadcast %101 : vector<16x1xf32> to vector<16x128xf32>
    %116 = arith.addf %114, %115 : vector<16x128xf32>
    %117 = tpu.concatenate %80, %80 in 0 : vector<8x128xf32>, vector<8x128xf32> -> vector<16x128xf32>
    %c72 = arith.constant 72 : index
    %c0_105 = arith.constant 0 : index
    %118 = vector.load %arg3[%c72, %c0_105] : memref<104x1xf32, #tpu.memory_space<vmem>>, vector<16x1xf32>
    %c88 = arith.constant 88 : index
    %c0_106 = arith.constant 0 : index
    %119 = vector.load %arg3[%c88, %c0_106] : memref<104x1xf32, #tpu.memory_space<vmem>>, vector<16x1xf32>
    %120 = arith.addf %116, %117 : vector<16x128xf32>
    %121 = vector.broadcast %118 : vector<16x1xf32> to vector<16x128xf32>
    %122 = arith.mulf %120, %121 : vector<16x128xf32>
    %123 = vector.broadcast %119 : vector<16x1xf32> to vector<16x128xf32>
    %124 = arith.addf %122, %123 : vector<16x128xf32>
    %cst_107 = arith.constant 0.000000e+00 : f32
    %125 = vector.broadcast %cst_107 : f32 to vector<16x128xf32>
    %126 = arith.maximumf %124, %125 : vector<16x128xf32>
    %c1_i32_108 = arith.constant 1 : i32
    %127 = tpu.dynamic_rotate %126 by %c1_i32_108 dim 1 : vector<16x128xf32>, i32 -> vector<16x128xf32>
    %128 = arith.maximumf %126, %127 : vector<16x128xf32>
    %c2_i32_109 = arith.constant 2 : i32
    %129 = tpu.dynamic_rotate %126 by %c2_i32_109 dim 1 : vector<16x128xf32>, i32 -> vector<16x128xf32>
    %130 = arith.maximumf %128, %129 : vector<16x128xf32>
    %c3_i32_110 = arith.constant 3 : i32
    %131 = tpu.dynamic_rotate %126 by %c3_i32_110 dim 1 : vector<16x128xf32>, i32 -> vector<16x128xf32>
    %132 = arith.maximumf %130, %131 : vector<16x128xf32>
    %c0_111 = arith.constant 0 : index
    %c0_112 = arith.constant 0 : index
    %133 = vector.load %arg9[%c0_111, %c0_112] : memref<128x32xf32, #tpu.memory_space<vmem>>, vector<128x32xf32>
    %cst_113 = arith.constant dense<0.000000e+00> : vector<16x32xf32>
    %134 = tpu.matmul %132, %133, %cst_113 {dimension_numbers = #tpu.dot_dimension_numbers<[1], [0], [0], [1], [0, 0, 1, 1], [], []>} : vector<16x128xf32>, vector<128x32xf32>, vector<16x32xf32> -> vector<16x32xf32>
    %c0_114 = arith.constant 0 : index
    %c0_115 = arith.constant 0 : index
    %135 = vector.load %arg10[%c0_114, %c0_115] : memref<2x32xf32, #tpu.memory_space<vmem>>, vector<2x32xf32>
    "tpu.trace_start"() <{level = 10 : i32, message = "iw,cw->ic"}> : () -> ()
    %cst_116 = arith.constant dense<0.000000e+00> : vector<2x16xf32>
    %136 = tpu.matmul %135, %134, %cst_116 {dimension_numbers = #tpu.dot_dimension_numbers<[1], [1], [0], [0], [0, 0, 1, 0], [], []>} : vector<2x32xf32>, vector<16x32xf32>, vector<2x16xf32> -> vector<2x16xf32>
    "tpu.trace_stop"() : () -> ()
    %c0_117 = arith.constant 0 : index
    %c0_118 = arith.constant 0 : index
    %137 = vector.load %arg4[%c0_117, %c0_118] : memref<16x15xf32, #tpu.memory_space<vmem>>, vector<16x15xf32>
    %cst_119 = arith.constant dense<0.000000e+00> : vector<2x15xf32>
    %138 = tpu.matmul %136, %137, %cst_119 {dimension_numbers = #tpu.dot_dimension_numbers<[1], [0], [0], [1], [0, 0, 1, 1], [], []>} : vector<2x16xf32>, vector<16x15xf32>, vector<2x15xf32> -> vector<2x15xf32>
    %c0_120 = arith.constant 0 : index
    %c0_121 = arith.constant 0 : index
    %139 = vector.load %arg5[%c0_120, %c0_121] : memref<1x15xf32, #tpu.memory_space<vmem>>, vector<1x15xf32>
    %140 = vector.broadcast %139 : vector<1x15xf32> to vector<2x15xf32>
    %141 = arith.addf %138, %140 : vector<2x15xf32>
    %cst_122 = arith.constant 0.000000e+00 : f32
    %142 = vector.broadcast %cst_122 : f32 to vector<2x15xf32>
    %143 = arith.subf %142, %141 : vector<2x15xf32>
    %144 = math.exp %143 : vector<2x15xf32>
    %cst_123 = arith.constant 1.000000e+00 : f32
    %145 = vector.broadcast %cst_123 : f32 to vector<2x15xf32>
    %146 = arith.addf %145, %144 : vector<2x15xf32>
    %cst_124 = arith.constant 1.000000e+00 : f32
    %147 = vector.broadcast %cst_124 : f32 to vector<2x15xf32>
    %148 = arith.divf %147, %146 : vector<2x15xf32>
    %c0_125 = arith.constant 0 : index
    %c0_126 = arith.constant 0 : index
    %149 = vector.load %arg11[%c0_125, %c0_126] : memref<2x15xf32, #tpu.memory_space<vmem>>, vector<2x15xf32>
    tpu.vector_store %arg11[%c0_125, %c0_126], %148 {strides = array<i32>} : memref<2x15xf32, #tpu.memory_space<vmem>>, vector<2x15xf32>,
    return
  }
  func.func @transform_0(%arg0: i32) -> (i32, i32) {
    %c0_i32 = arith.constant 0 : i32
    %c0_i32_0 = arith.constant 0 : i32
    return %arg0, %c0_i32 : i32, i32
  }
  func.func @transform_1(%arg0: i32) -> (i32, i32) {
    %c0_i32 = arith.constant 0 : i32
    %c0_i32_0 = arith.constant 0 : i32
    %c0_i32_1 = arith.constant 0 : i32
    return %c0_i32, %c0_i32_0 : i32, i32
  }
  func.func @transform_2(%arg0: i32) -> (i32, i32) {
    %c0_i32 = arith.constant 0 : i32
    %c0_i32_0 = arith.constant 0 : i32
    %c0_i32_1 = arith.constant 0 : i32
    return %c0_i32, %c0_i32_0 : i32, i32
  }
  func.func @transform_3(%arg0: i32) -> (i32, i32) {
    %c0_i32 = arith.constant 0 : i32
    %c0_i32_0 = arith.constant 0 : i32
    %c0_i32_1 = arith.constant 0 : i32
    return %c0_i32, %c0_i32_0 : i32, i32
  }
  func.func @transform_4(%arg0: i32) -> (i32, i32) {
    %c0_i32 = arith.constant 0 : i32
    %c0_i32_0 = arith.constant 0 : i32
    %c0_i32_1 = arith.constant 0 : i32
    return %c0_i32, %c0_i32_0 : i32, i32
  }
  func.func @transform_5(%arg0: i32) -> (i32, i32) {
    %c0_i32 = arith.constant 0 : i32
    %c0_i32_0 = arith.constant 0 : i32
    %c0_i32_1 = arith.constant 0 : i32
    return %c0_i32, %c0_i32_0 : i32, i32
  }
  func.func @transform_6(%arg0: i32) -> (i32, i32) {
    %c0_i32 = arith.constant 0 : i32
    %c0_i32_0 = arith.constant 0 : i32
    %c0_i32_1 = arith.constant 0 : i32
    return %c0_i32, %c0_i32_0 : i32, i32
  }
  func.func @transform_7(%arg0: i32) -> (i32, i32) {
    %c0_i32 = arith.constant 0 : i32
    %c0_i32_0 = arith.constant 0 : i32
    %c0_i32_1 = arith.constant 0 : i32
    return %c0_i32, %c0_i32_0 : i32, i32
  }
  func.func @transform_8(%arg0: i32) -> (i32, i32) {
    %c0_i32 = arith.constant 0 : i32
    %c0_i32_0 = arith.constant 0 : i32
    %c0_i32_1 = arith.constant 0 : i32
    return %c0_i32, %c0_i32_0 : i32, i32
  }
  func.func @transform_9(%arg0: i32) -> (i32, i32) {
    %c0_i32 = arith.constant 0 : i32
    %c0_i32_0 = arith.constant 0 : i32
    %c0_i32_1 = arith.constant 0 : i32
    return %c0_i32, %c0_i32_0 : i32, i32
  }
  func.func @transform_10(%arg0: i32) -> (i32, i32) {
    %c0_i32 = arith.constant 0 : i32
    %c0_i32_0 = arith.constant 0 : i32
    return %arg0, %c0_i32 : i32, i32
  }
}

</mosaic_0001>

<llo_original>
// kernel: tpu_custom_call.1
$region0: #{tpu_custom_call.1}
  #allocation0 [shape = 'u32[]', space=smem, size = 0x4, offset = 0x4, fixed_abs, tag = 'smem constant byte address 0x4 - core index']
  #allocation1 [shape = 'u32[144,128]{1,0:T(1,128)}', space=vmem, size = 0x12000, scoped, tag = 'internal scratch']
  #allocation2 [shape = 'f32[8,512]{1,0:T(8,128)}', space=vmem, size = 0x4000, scoped, tag = 'scratch operand']
  #allocation3 [shape = 'f32[24,128]{1,0:T(8,128)}', space=vmem, size = 0x3000, scoped, tag = 'scratch operand']
  #allocation4 [shape = 'f32[24,128]{1,0:T(8,128)}', space=vmem, size = 0x3000, scoped, tag = 'scratch operand']
  #allocation5 [shape = 'f32[24,128]{1,0:T(8,128)}', space=vmem, size = 0x3000, scoped, tag = 'scratch operand']
  #allocation6 [shape = 'f32[48,128]{1,0:T(8,128)}', space=vmem, size = 0x6000, scoped, tag = 'scratch operand']
  %s0 = inlined_call_operand.vmem [shape: f32[1,512], index: 0, kind: input, shape index: {}]
  %s1 = inlined_call_operand.vmem [shape: f32[56,48], index: 1, kind: input, shape index: {}]
  %s2 = inlined_call_operand.vmem [shape: f32[104,1], index: 2, kind: input, shape index: {}]
  %s3 = inlined_call_operand.vmem [shape: f32[16,15], index: 3, kind: input, shape index: {}]
  %s4 = inlined_call_operand.vmem [shape: f32[1,15], index: 4, kind: input, shape index: {}]
  %s5 = inlined_call_operand.vmem [shape: f32[5,512], index: 5, kind: input, shape index: {}]
  %s6 = inlined_call_operand.vmem [shape: f32[3,128], index: 6, kind: input, shape index: {}]
  %s7 = inlined_call_operand.hbm [shape: f32[512,128], index: 7, kind: input, shape index: {}]
  %s8 = inlined_call_operand.vmem [shape: f32[128,32], index: 8, kind: input, shape index: {}]
  %s9 = inlined_call_operand.vmem [shape: f32[2,32], index: 9, kind: input, shape index: {}]
  %s10 = inlined_call_operand.hbm [shape: f32[2,15], index: 10, kind: output, shape index: {}]
  %s11 = sld [smem:[#allocation0]]
  $region54: #{tpu_custom_call.1} parent=0
    _
  %s13 = ssub.s32 1, %s11
  %s14 = scalar_select 0, %s13, %s11
  $region1: #{tpu_custom_call.1} parent=0
    #allocation7 [shape = 'u8[262144]{0}', space=vmem, size = 0x40000, scoped, tag = 'input window, operand 7, single buffered']
    #allocation8 [shape = 's32[1]{0}', space=sflag, size = 0x4, scoped, tag = 'scoped memory for tpu_custom_call.1']
    #allocation9 [shape = 's32[1]{0}', space=sflag, size = 0x4, scoped, tag = 'scoped memory for tpu_custom_call.1']
    #allocation10 [shape = 'u8[1024]{0}', space=vmem, size = 0x400, scoped, tag = 'output window, operand 0, single buffered']
    %15 = vsyncpa [#allocation8], 0
    %16 = vsyncpa [#allocation9], 0
    // Predicated region
    $region2: #{tpu_custom_call.1} parent=1 // pred_check
      _
    $region3: #{tpu_custom_call.1} parent=1 // pred_check_branch
      %18 = sbr.rel (0) target = $region5
    $region4: #{tpu_custom_call.1} parent=1 // pred_region
      _
    $region5: #{tpu_custom_call.1} parent=1 // pred_fallthru
      _
    // Predicated region
    $region6: #{tpu_custom_call.1} parent=1 // pred_check
      _
    $region7: #{tpu_custom_call.1} parent=1 // pred_check_branch
      %20 = sbr.rel (0) target = $region9
    $region8: #{tpu_custom_call.1} parent=1 // pred_region
      _
    $region9: #{tpu_custom_call.1} parent=1 // pred_fallthru
      _
    // Predicated region
    $region10: #{tpu_custom_call.1} parent=1 // pred_check
      _
    $region11: #{tpu_custom_call.1} parent=1 // pred_check_branch
      %22 = sbr.rel (0) target = $region13
    $region12: #{tpu_custom_call.1} parent=1 // pred_region
      _
    $region13: #{tpu_custom_call.1} parent=1 // pred_fallthru
      _
    // Predicated region
    $region14: #{tpu_custom_call.1} parent=1 // pred_check
      _
    $region15: #{tpu_custom_call.1} parent=1 // pred_check_branch
      %24 = sbr.rel (0) target = $region17
    $region16: #{tpu_custom_call.1} parent=1 // pred_region
      _
    $region17: #{tpu_custom_call.1} parent=1 // pred_fallthru
      _
    // Predicated region
    $region18: #{tpu_custom_call.1} parent=1 // pred_check
      _
    $region19: #{tpu_custom_call.1} parent=1 // pred_check_branch
      %26 = sbr.rel (0) target = $region21
    $region20: #{tpu_custom_call.1} parent=1 // pred_region
      _
    $region21: #{tpu_custom_call.1} parent=1 // pred_fallthru
      _
    // Predicated region
    $region22: #{tpu_custom_call.1} parent=1 // pred_check
      _
    $region23: #{tpu_custom_call.1} parent=1 // pred_check_branch
      %28 = sbr.rel (0) target = $region25
    $region24: #{tpu_custom_call.1} parent=1 // pred_region
      _
    $region25: #{tpu_custom_call.1} parent=1 // pred_fallthru
      _
    // Predicated region
    $region26: #{tpu_custom_call.1} parent=1 // pred_check
      _
    $region27: #{tpu_custom_call.1} parent=1 // pred_check_branch
      %30 = sbr.rel (0) target = $region29
    $region28: #{tpu_custom_call.1} parent=1 // pred_region
      _
    $region29: #{tpu_custom_call.1} parent=1 // pred_fallthru
      _
    // Predicated region
    $region30: #{tpu_custom_call.1} parent=1 // pred_check
      _
    $region31: #{tpu_custom_call.1} parent=1 // pred_check_branch
      %32 = sbr.rel (0) target = $region33
    $region32: #{tpu_custom_call.1} parent=1 // pred_region
      %s34 = ssub.s32 8192, 8192
      %35 = vsyncadd [#allocation8], %s34
      %s36 = sshll.u32 [#allocation7], 4
      %s37 = int_to_ptr.vmem [resolvable:$true] %s36
      %42 = dma.hbm_to_vmem [thread:$0]  %s7, 8192, %s37, [#allocation8], 128, 128, 8
    $region33: #{tpu_custom_call.1} parent=1 // pred_fallthru
      _
    // Predicated region
    $region34: #{tpu_custom_call.1} parent=1 // pred_check
      _
    $region35: #{tpu_custom_call.1} parent=1 // pred_check_branch
      %44 = sbr.rel (0) target = $region37
    $region36: #{tpu_custom_call.1} parent=1 // pred_region
      _
    $region37: #{tpu_custom_call.1} parent=1 // pred_fallthru
      _
    // Predicated region
    $region38: #{tpu_custom_call.1} parent=1 // pred_check
      _
    $region39: #{tpu_custom_call.1} parent=1 // pred_check_branch
      %46 = sbr.rel (0) target = $region41
    $region40: #{tpu_custom_call.1} parent=1 // pred_region
      _
    $region41: #{tpu_custom_call.1} parent=1 // pred_fallthru
      _
    // Predicated region
    $region42: #{tpu_custom_call.1} parent=1 // pred_check
      _
    $region43: #{tpu_custom_call.1} parent=1 // pred_check_branch
      %48 = sbr.rel (0) target = $region45
    $region44: #{tpu_custom_call.1} parent=1 // pred_region
      %49 = dma.done [#allocation8], 8192
    $region45: #{tpu_custom_call.1} parent=1 // pred_fallthru
      _
    %v50 = vld [vmem:[%s0] sm:$0xf]
    %v51 = vld [vmem:[%s1] sm:$0xff]
    %v52 = vld [vmem:[%s2] sm:$0xff]
    %53 = vst [vmem:[#allocation2] sm:$0xe0] 0.0
    %54 = vst [vmem:[#allocation2 + $0x8] sm:$0xe0] 0.0
    %55 = vst [vmem:[#allocation2 + $0x10] sm:$0xe0] 0.0
    %56 = vst [vmem:[#allocation2 + $0x18] sm:$0xe0] 0.0
    %v58 = vlaneseq
    %v59 = vshrl.u32 %v58, 7
    %v60 = vsub.s32 0, %v59
    %v61 = vrot.slane %v50, %v60
    %v62 = vlaneseq
    %v63 = vshrl.u32 %v62, 7
    %v64 = vsub.s32 1, %v63
    %v65 = vrot.slane %v50, %v64
    %v66 = vlaneseq
    %v67 = vshrl.u32 %v66, 7
    %v68 = vsub.s32 2, %v67
    %v69 = vrot.slane %v50, %v68
    %v70 = vlaneseq
    %v71 = vshrl.u32 %v70, 7
    %v72 = vsub.s32 3, %v71
    %v73 = vrot.slane %v50, %v72
    %78 = vrot.lane.b32.xlu0 %v61, 2
    %v79 = vpop.permute.xlu0 %78
    %80 = vrot.lane.b32.xlu0 %v65, 2
    %v81 = vpop.permute.xlu0 %80
    %82 = vrot.lane.b32.xlu0 %v69, 2
    %v83 = vpop.permute.xlu0 %82
    %84 = vrot.lane.b32.xlu0 %v73, 2
    %v85 = vpop.permute.xlu0 %84
    %v86 = vlaneseq
    %v87 = vand.u32 %v86, 127
    %vm88 = vcmp.lt.s32.totalorder %v87, 2
    %v89 = vsel %vm88, %v83, %v85
    %v90 = vsel %vm88, %v81, %v83
    %v91 = vsel %vm88, %v79, %v81
    %v92 = vsel %vm88, %v85, %v79
    %v93 = vld [vmem:[%s5] ss:$8 sm:$0xf]
    %v95 = vlaneseq
    %v96 = vshrl.u32 %v95, 7
    %v97 = vsub.s32 0, %v96
    %v98 = vrot.slane %v93, %v97
    %v99 = vlaneseq
    %v100 = vshrl.u32 %v99, 7
    %v101 = vsub.s32 1, %v100
    %v102 = vrot.slane %v93, %v101
    %v103 = vlaneseq
    %v104 = vshrl.u32 %v103, 7
    %v105 = vsub.s32 2, %v104
    %v106 = vrot.slane %v93, %v105
    %v107 = vlaneseq
    %v108 = vshrl.u32 %v107, 7
    %v109 = vsub.s32 3, %v108
    %v110 = vrot.slane %v93, %v109
    %v115 = vmul.f32 %v92, %v98
    %v116 = vmul.f32 %v91, %v102
    %v117 = vmul.f32 %v90, %v106
    %v118 = vmul.f32 %v89, %v110
    %v123 = vcombine.low %v115, %v116
    %v124 = vcombine.low %v117, %v118
    %v126 = vunpack.c.l.s4 1966171168
    %v127 = vunpack.c.0.s8 %v126
    %v128 = vlaneseq
    %v129 = vshrl.u32 %v128, 7
    %v130 = vsub.s32 %v127, %v129
    %v131 = vrot.slane %v123, %v130
    %v133 = vunpack.c.l.s4 1966171168
    %v134 = vunpack.c.0.s8 %v133
    %v135 = vlaneseq
    %v136 = vshrl.u32 %v135, 7
    %v137 = vsub.s32 %v134, %v136
    %v138 = vrot.slane %v124, %v137
    %v139 = vcombine.low %v131, %v138
    %v141 = vunpack.c.l.s4 1966171168
    %v142 = vunpack.c.0.s8 %v141
    %v143 = vlaneseq
    %v144 = vshrl.u32 %v143, 7
    %v145 = vsub.s32 %v142, %v144
    %v146 = vrot.slane %v139, %v145
    %v148 = vlaneseq
    %vm149 = vcmp.ge.s32.totalorder %v148, 0
    %vm150 = vcmp.lt.s32.totalorder %v148, 512
    %vm151 = vmand %vm149, %vm150
    %152 = vst.msk [vmem:[#allocation2] ss:$8 sm:$0xf] %vm151, %v146
    %153 = vst.msk [vmem:[#allocation2] ss:$8 sm:$0x0] %vm151, %v146
    %154 = vrot.lane.b32.xlu0 %v61, 1
    %v155 = vpop.permute.xlu0 %154
    %156 = vrot.lane.b32.xlu0 %v65, 1
    %v157 = vpop.permute.xlu0 %156
    %158 = vrot.lane.b32.xlu0 %v69, 1
    %v159 = vpop.permute.xlu0 %158
    %160 = vrot.lane.b32.xlu0 %v73, 1
    %v161 = vpop.permute.xlu0 %160
    %vm162 = vcmp.lt.s32.totalorder %v87, 1
    %v163 = vsel %vm162, %v159, %v161
    %v164 = vsel %vm162, %v157, %v159
    %v165 = vsel %vm162, %v155, %v157
    %v166 = vsel %vm162, %v161, %v155
    %s167 = scalar_lea.vmem %s5, 1
    %v168 = vld [vmem:[%s167] ss:$8 sm:$0xf]
    %v170 = vlaneseq
    %v171 = vshrl.u32 %v170, 7
    %v172 = vsub.s32 0, %v171
    %v173 = vrot.slane %v168, %v172
    %v174 = vlaneseq
    %v175 = vshrl.u32 %v174, 7
    %v176 = vsub.s32 1, %v175
    %v177 = vrot.slane %v168, %v176
    %v178 = vlaneseq
    %v179 = vshrl.u32 %v178, 7
    %v180 = vsub.s32 2, %v179
    %v181 = vrot.slane %v168, %v180
    %v182 = vlaneseq
    %v183 = vshrl.u32 %v182, 7
    %v184 = vsub.s32 3, %v183
    %v185 = vrot.slane %v168, %v184
    %v190 = vmul.f32 %v166, %v173
    %v191 = vmul.f32 %v165, %v177
    %v192 = vmul.f32 %v164, %v181
    %v193 = vmul.f32 %v163, %v185
    %v198 = vcombine.low %v190, %v191
    %v199 = vcombine.low %v192, %v193
    %v201 = vunpack.c.l.s4 1966171168
    %v202 = vunpack.c.0.s8 %v201
    %v203 = vlaneseq
    %v204 = vshrl.u32 %v203, 7
    %v205 = vsub.s32 %v202, %v204
    %v206 = vrot.slane %v198, %v205
    %v208 = vunpack.c.l.s4 1966171168
    %v209 = vunpack.c.0.s8 %v208
    %v210 = vlaneseq
    %v211 = vshrl.u32 %v210, 7
    %v212 = vsub.s32 %v209, %v211
    %v213 = vrot.slane %v199, %v212
    %v214 = vcombine.low %v206, %v213
    %v216 = vunpack.c.l.s4 1966171168
    %v217 = vunpack.c.0.s8 %v216
    %v218 = vlaneseq
    %v219 = vshrl.u32 %v218, 7
    %v220 = vsub.s32 %v217, %v219
    %v221 = vrot.slane %v214, %v220
    %s223 = scalar_lea.vmem [#allocation2], 1
    %224 = vst.msk [vmem:[%s223] ss:$8 sm:$0xf] %vm151, %v221
    %225 = vst.msk [vmem:[%s223] ss:$8 sm:$0x0] %vm151, %v221
    %s226 = scalar_lea.vmem [#allocation2], 2
    %227 = vst.msk [vmem:[%s226] ss:$8 sm:$0xf] %vm151, %v50
    %228 = vst.msk [vmem:[%s226] ss:$8 sm:$0x0] %vm151, %v50
    %229 = vrot.lane.b32.xlu0 %v61, 127
    %v230 = vpop.permute.xlu0 %229
    %231 = vrot.lane.b32.xlu0 %v65, 127
    %v232 = vpop.permute.xlu0 %231
    %233 = vrot.lane.b32.xlu0 %v69, 127
    %v234 = vpop.permute.xlu0 %233
    %235 = vrot.lane.b32.xlu0 %v73, 127
    %v236 = vpop.permute.xlu0 %235
    %vm237 = vcmp.lt.s32.totalorder %v87, 127
    %v238 = vsel %vm237, %v234, %v236
    %v239 = vsel %vm237, %v232, %v234
    %v240 = vsel %vm237, %v230, %v232
    %v241 = vsel %vm237, %v236, %v230
    %s242 = scalar_lea.vmem %s5, 3
    %v243 = vld [vmem:[%s242] ss:$8 sm:$0xf]
    %v245 = vlaneseq
    %v246 = vshrl.u32 %v245, 7
    %v247 = vsub.s32 0, %v246
    %v248 = vrot.slane %v243, %v247
    %v249 = vlaneseq
    %v250 = vshrl.u32 %v249, 7
    %v251 = vsub.s32 1, %v250
    %v252 = vrot.slane %v243, %v251
    %v253 = vlaneseq
    %v254 = vshrl.u32 %v253, 7
    %v255 = vsub.s32 2, %v254
    %v256 = vrot.slane %v243, %v255
    %v257 = vlaneseq
    %v258 = vshrl.u32 %v257, 7
    %v259 = vsub.s32 3, %v258
    %v260 = vrot.slane %v243, %v259
    %v265 = vmul.f32 %v240, %v248
    %v266 = vmul.f32 %v239, %v252
    %v267 = vmul.f32 %v238, %v256
    %v268 = vmul.f32 %v241, %v260
    %v273 = vcombine.low %v265, %v266
    %v274 = vcombine.low %v267, %v268
    %v276 = vunpack.c.l.s4 1966171168
    %v277 = vunpack.c.0.s8 %v276
    %v278 = vlaneseq
    %v279 = vshrl.u32 %v278, 7
    %v280 = vsub.s32 %v277, %v279
    %v281 = vrot.slane %v273, %v280
    %v283 = vunpack.c.l.s4 1966171168
    %v284 = vunpack.c.0.s8 %v283
    %v285 = vlaneseq
    %v286 = vshrl.u32 %v285, 7
    %v287 = vsub.s32 %v284, %v286
    %v288 = vrot.slane %v274, %v287
    %v289 = vcombine.low %v281, %v288
    %v291 = vunpack.c.l.s4 1966171168
    %v292 = vunpack.c.0.s8 %v291
    %v293 = vlaneseq
    %v294 = vshrl.u32 %v293, 7
    %v295 = vsub.s32 %v292, %v294
    %v296 = vrot.slane %v289, %v295
    %s298 = scalar_lea.vmem [#allocation2], 3
    %299 = vst.msk [vmem:[%s298] ss:$8 sm:$0xf] %vm151, %v296
    %300 = vst.msk [vmem:[%s298] ss:$8 sm:$0x0] %vm151, %v296
    %301 = vrot.lane.b32.xlu0 %v61, 126
    %v302 = vpop.permute.xlu0 %301
    %303 = vrot.lane.b32.xlu0 %v65, 126
    %v304 = vpop.permute.xlu0 %303
    %305 = vrot.lane.b32.xlu0 %v69, 126
    %v306 = vpop.permute.xlu0 %305
    %307 = vrot.lane.b32.xlu0 %v73, 126
    %v308 = vpop.permute.xlu0 %307
    %vm309 = vcmp.lt.s32.totalorder %v87, 126
    %v310 = vsel %vm309, %v306, %v308
    %v311 = vsel %vm309, %v304, %v306
    %v312 = vsel %vm309, %v302, %v304
    %v313 = vsel %vm309, %v308, %v302
    %s314 = scalar_lea.vmem %s5, 4
    %v315 = vld [vmem:[%s314] ss:$8 sm:$0xf]
    %v317 = vlaneseq
    %v318 = vshrl.u32 %v317, 7
    %v319 = vsub.s32 0, %v318
    %v320 = vrot.slane %v315, %v319
    %v321 = vlaneseq
    %v322 = vshrl.u32 %v321, 7
    %v323 = vsub.s32 1, %v322
    %v324 = vrot.slane %v315, %v323
    %v325 = vlaneseq
    %v326 = vshrl.u32 %v325, 7
    %v327 = vsub.s32 2, %v326
    %v328 = vrot.slane %v315, %v327
    %v329 = vlaneseq
    %v330 = vshrl.u32 %v329, 7
    %v331 = vsub.s32 3, %v330
    %v332 = vrot.slane %v315, %v331
    %v337 = vmul.f32 %v312, %v320
    %v338 = vmul.f32 %v311, %v324
    %v339 = vmul.f32 %v310, %v328
    %v340 = vmul.f32 %v313, %v332
    %v345 = vcombine.low %v337, %v338
    %v346 = vcombine.low %v339, %v340
    %v348 = vunpack.c.l.s4 1966171168
    %v349 = vunpack.c.0.s8 %v348
    %v350 = vlaneseq
    %v351 = vshrl.u32 %v350, 7
    %v352 = vsub.s32 %v349, %v351
    %v353 = vrot.slane %v345, %v352
    %v355 = vunpack.c.l.s4 1966171168
    %v356 = vunpack.c.0.s8 %v355
    %v357 = vlaneseq
    %v358 = vshrl.u32 %v357, 7
    %v359 = vsub.s32 %v356, %v358
    %v360 = vrot.slane %v346, %v359
    %v361 = vcombine.low %v353, %v360
    %v363 = vunpack.c.l.s4 1966171168
    %v364 = vunpack.c.0.s8 %v363
    %v365 = vlaneseq
    %v366 = vshrl.u32 %v365, 7
    %v367 = vsub.s32 %v364, %v366
    %v368 = vrot.slane %v361, %v367
    %s370 = scalar_lea.vmem [#allocation2], 4
    %371 = vst.msk [vmem:[%s370] ss:$8 sm:$0xf] %vm151, %v368
    %372 = vst.msk [vmem:[%s370] ss:$8 sm:$0x0] %vm151, %v368
    %v373 = vld [vmem:[#allocation2] sm:$0xff]
    %v374 = vld [vmem:[#allocation2 + $0x8] sm:$0xff]
    %v375 = vld [vmem:[#allocation2 + $0x10] sm:$0xff]
    %v376 = vld [vmem:[#allocation2 + $0x18] sm:$0xff]
    %378 = vset.pattern.permute.xlu0 0
    %379 = vperm.xlu0 %378, %v52
    %v380 = vpop.permute.xlu0 %379
    %vm382 = vcmask 64512
    %v384 = vsel %vm382, %v51, 0
    %386 = vmatprep.subr.mxu0 %v374
    %387 = vmatpush1.msra.mxu0 %v373
    %388 = vmatprep.subr.mxu0 0.0
    %389 = vmatpush1.msra.mxu0 0.0
    %390 = vmatprep.subr.mxu0 0.0
    %391 = vmatpush1.msra.mxu0 0.0
    %392 = vmatprep.subr.mxu0 0.0
    %393 = vmatpush1.msra.mxu0 0.0
    %394 = vmatprep.subr.mxu0 0.0
    %395 = vmatpush1.msra.mxu0 0.0
    %396 = vmatprep.subr.mxu0 0.0
    %397 = vmatpush1.msra.mxu0 0.0
    %398 = vmatprep.subr.mxu0 0.0
    %399 = vmatpush1.msra.mxu0 0.0
    %400 = vmatprep.subr.mxu0 0.0
    %401 = vmatpush1.msra.mxu0 0.0
    %402 = vmatprep.subr.mxu0 0.0
    %403 = vmatpush1.msra.mxu0 0.0
    %404 = vmatprep.subr.mxu0 0.0
    %405 = vmatpush1.msra.mxu0 0.0
    %406 = vmatprep.subr.mxu0 0.0
    %407 = vmatpush1.msra.mxu0 0.0
    %408 = vmatprep.subr.mxu0 0.0
    %409 = vmatpush1.msra.mxu0 0.0
    %410 = vmatprep.subr.mxu0 0.0
    %411 = vmatpush1.msra.mxu0 0.0
    %412 = vmatprep.subr.mxu0 0.0
    %413 = vmatpush1.msra.mxu0 0.0
    %414 = vmatprep.subr.mxu0 0.0
    %415 = vmatpush1.msra.mxu0 0.0
    %416 = vmatprep.subr.mxu0 0.0
    %417 = vmatpush1.msra.mxu0 0.0
    %418 = vmatprep.subr.mxu0 0.0
    %419 = vmatpush1.msra.mxu0 0.0
    %420 = vmatprep.subr.mxu0 0.0
    %421 = vmatpush1.msra.mxu0 0.0
    %422 = vmatprep.subr.mxu0 0.0
    %423 = vmatpush1.msra.mxu0 0.0
    %424 = vmatprep.subr.mxu0 0.0
    %425 = vmatpush1.msra.mxu0 0.0
    %426 = vmatprep.subr.mxu0 0.0
    %427 = vmatpush1.msra.mxu0 0.0
    %428 = vmatprep.subr.mxu0 0.0
    %429 = vmatpush1.msra.mxu0 0.0
    %430 = vmatprep.subr.mxu0 0.0
    %431 = vmatpush1.msra.mxu0 0.0
    %432 = vmatprep.subr.mxu0 0.0
    %433 = vmatpush1.msra.mxu0 0.0
    %434 = vmatprep.subr.mxu0 0.0
    %435 = vmatpush1.msra.mxu0 0.0
    %436 = vmatprep.subr.mxu0 0.0
    %437 = vmatpush1.msra.mxu0 0.0
    %438 = vmatprep.subr.mxu0 0.0
    %439 = vmatpush1.msra.mxu0 0.0
    %440 = vmatprep.subr.mxu0 0.0
    %441 = vmatpush1.msra.mxu0 0.0
    %442 = vmatprep.subr.mxu0 0.0
    %443 = vmatpush1.msra.mxu0 0.0
    %444 = vmatprep.subr.mxu0 0.0
    %445 = vmatpush1.msra.mxu0 0.0
    %446 = vmatprep.subr.mxu0 0.0
    %447 = vmatpush1.msra.mxu0 0.0
    %448 = vmatprep.subr.mxu0 0.0
    %449 = vmatpush1.msra.mxu0 0.0
    %450 = vmatprep.mubr.f32.mxu0 0.0
    %451 = vmatmul.mubr.f32.gmra.mrb[0].mxu0 %v384
    %v452 = vpop.f32.mrb[0].mxu0
    %v453 = vadd.f32 %v380, %v452
    %v454 = vpop.f32.mrb[0].mxu0
    %v455 = vadd.f32 %v380, %v454
    %456 = vdwg.mxu0
    %457 = vmatprep.subr.mxu0 %v376
    %458 = vmatpush1.msra.mxu0 %v375
    %459 = vmatprep.subr.mxu0 0.0
    %460 = vmatpush1.msra.mxu0 0.0
    %461 = vmatprep.subr.mxu0 0.0
    %462 = vmatpush1.msra.mxu0 0.0
    %463 = vmatprep.subr.mxu0 0.0
    %464 = vmatpush1.msra.mxu0 0.0
    %465 = vmatprep.subr.mxu0 0.0
    %466 = vmatpush1.msra.mxu0 0.0
    %467 = vmatprep.subr.mxu0 0.0
    %468 = vmatpush1.msra.mxu0 0.0
    %469 = vmatprep.subr.mxu0 0.0
    %470 = vmatpush1.msra.mxu0 0.0
    %471 = vmatprep.subr.mxu0 0.0
    %472 = vmatpush1.msra.mxu0 0.0
    %473 = vmatprep.subr.mxu0 0.0
    %474 = vmatpush1.msra.mxu0 0.0
    %475 = vmatprep.subr.mxu0 0.0
    %476 = vmatpush1.msra.mxu0 0.0
    %477 = vmatprep.subr.mxu0 0.0
    %478 = vmatpush1.msra.mxu0 0.0
    %479 = vmatprep.subr.mxu0 0.0
    %480 = vmatpush1.msra.mxu0 0.0
    %481 = vmatprep.subr.mxu0 0.0
    %482 = vmatpush1.msra.mxu0 0.0
    %483 = vmatprep.subr.mxu0 0.0
    %484 = vmatpush1.msra.mxu0 0.0
    %485 = vmatprep.subr.mxu0 0.0
    %486 = vmatpush1.msra.mxu0 0.0
    %487 = vmatprep.subr.mxu0 0.0
    %488 = vmatpush1.msra.mxu0 0.0
    %489 = vmatprep.subr.mxu0 0.0
    %490 = vmatpush1.msra.mxu0 0.0
    %491 = vmatprep.subr.mxu0 0.0
    %492 = vmatpush1.msra.mxu0 0.0
    %493 = vmatprep.subr.mxu0 0.0
    %494 = vmatpush1.msra.mxu0 0.0
    %495 = vmatprep.subr.mxu0 0.0
    %496 = vmatpush1.msra.mxu0 0.0
    %497 = vmatprep.subr.mxu0 0.0
    %498 = vmatpush1.msra.mxu0 0.0
    %499 = vmatprep.subr.mxu0 0.0
    %500 = vmatpush1.msra.mxu0 0.0
    %501 = vmatprep.subr.mxu0 0.0
    %502 = vmatpush1.msra.mxu0 0.0
    %503 = vmatprep.subr.mxu0 0.0
    %504 = vmatpush1.msra.mxu0 0.0
    %505 = vmatprep.subr.mxu0 0.0
    %506 = vmatpush1.msra.mxu0 0.0
    %507 = vmatprep.subr.mxu0 0.0
    %508 = vmatpush1.msra.mxu0 0.0
    %509 = vmatprep.subr.mxu0 0.0
    %510 = vmatpush1.msra.mxu0 0.0
    %511 = vmatprep.subr.mxu0 0.0
    %512 = vmatpush1.msra.mxu0 0.0
    %513 = vmatprep.subr.mxu0 0.0
    %514 = vmatpush1.msra.mxu0 0.0
    %515 = vmatprep.subr.mxu0 0.0
    %516 = vmatpush1.msra.mxu0 0.0
    %517 = vmatprep.subr.mxu0 0.0
    %518 = vmatpush1.msra.mxu0 0.0
    %519 = vmatprep.subr.mxu0 0.0
    %520 = vmatpush1.msra.mxu0 0.0
    %521 = vmatprep.mubr.f32.mxu0 0.0
    %522 = vmatmul.mubr.f32.gmra.mrb[0].mxu0 %v384
    %v523 = vpop.f32.mrb[0].mxu0
    %v524 = vadd.f32 %v380, %v523
    %v525 = vpop.f32.mrb[0].mxu0
    %v526 = vadd.f32 %v380, %v525
    %527 = vdwg.mxu0
    %v528 = vmax.f32 %v453, 0.0
    %v529 = vmax.f32 %v455, 0.0
    %v530 = vmax.f32 %v524, 0.0
    %v531 = vmax.f32 %v526, 0.0
    %532 = vrot.lane.b32.xlu0 %v528, 1
    %v533 = vpop.permute.xlu0 %532
    %534 = vrot.lane.b32.xlu0 %v529, 1
    %v535 = vpop.permute.xlu0 %534
    %536 = vrot.lane.b32.xlu0 %v530, 1
    %v537 = vpop.permute.xlu0 %536
    %538 = vrot.lane.b32.xlu0 %v531, 1
    %v539 = vpop.permute.xlu0 %538
    %v540 = vsel %vm162, %v537, %v539
    %v541 = vsel %vm162, %v535, %v537
    %v542 = vsel %vm162, %v533, %v535
    %v543 = vsel %vm162, %v539, %v533
    %v544 = vmax.f32 %v528, %v543
    %v545 = vmax.f32 %v529, %v542
    %v546 = vmax.f32 %v530, %v541
    %v547 = vmax.f32 %v531, %v540
    %548 = vrot.lane.b32.xlu0 %v528, 2
    %v549 = vpop.permute.xlu0 %548
    %550 = vrot.lane.b32.xlu0 %v529, 2
    %v551 = vpop.permute.xlu0 %550
    %552 = vrot.lane.b32.xlu0 %v530, 2
    %v553 = vpop.permute.xlu0 %552
    %554 = vrot.lane.b32.xlu0 %v531, 2
    %v555 = vpop.permute.xlu0 %554
    %v556 = vsel %vm88, %v553, %v555
    %v557 = vsel %vm88, %v551, %v553
    %v558 = vsel %vm88, %v549, %v551
    %v559 = vsel %vm88, %v555, %v549
    %v560 = vmax.f32 %v544, %v559
    %v561 = vmax.f32 %v545, %v558
    %v562 = vmax.f32 %v546, %v557
    %v563 = vmax.f32 %v547, %v556
    %564 = vrot.lane.b32.xlu0 %v528, 3
    %v565 = vpop.permute.xlu0 %564
    %566 = vrot.lane.b32.xlu0 %v529, 3
    %v567 = vpop.permute.xlu0 %566
    %568 = vrot.lane.b32.xlu0 %v530, 3
    %v569 = vpop.permute.xlu0 %568
    %570 = vrot.lane.b32.xlu0 %v531, 3
    %v571 = vpop.permute.xlu0 %570
    %vm572 = vcmp.lt.s32.totalorder %v87, 3
    %v573 = vsel %vm572, %v569, %v571
    %v574 = vsel %vm572, %v567, %v569
    %v575 = vsel %vm572, %v565, %v567
    %v576 = vsel %vm572, %v571, %v565
    %v577 = vmax.f32 %v560, %v576
    %v578 = vmax.f32 %v561, %v575
    %v579 = vmax.f32 %v562, %v574
    %v580 = vmax.f32 %v563, %v573
    %v581 = vld [vmem:[#allocation7] sm:$0xff]
    %v582 = vld [vmem:[#allocation7 + $0x8] sm:$0xff]
    %v583 = vld [vmem:[#allocation7 + $0x10] sm:$0xff]
    %v584 = vld [vmem:[#allocation7 + $0x18] sm:$0xff]
    %v585 = vld [vmem:[#allocation7 + $0x20] sm:$0xff]
    %v586 = vld [vmem:[#allocation7 + $0x28] sm:$0xff]
    %v587 = vld [vmem:[#allocation7 + $0x30] sm:$0xff]
    %v588 = vld [vmem:[#allocation7 + $0x38] sm:$0xff]
    %v589 = vld [vmem:[#allocation7 + $0x40] sm:$0xff]
    %v590 = vld [vmem:[#allocation7 + $0x48] sm:$0xff]
    %v591 = vld [vmem:[#allocation7 + $0x50] sm:$0xff]
    %v592 = vld [vmem:[#allocation7 + $0x58] sm:$0xff]
    %v593 = vld [vmem:[#allocation7 + $0x60] sm:$0xff]
    %v594 = vld [vmem:[#allocation7 + $0x68] sm:$0xff]
    %v595 = vld [vmem:[#allocation7 + $0x70] sm:$0xff]
    %v596 = vld [vmem:[#allocation7 + $0x78] sm:$0xff]
    %v597 = vld [vmem:[#allocation7 + $0x80] sm:$0xff]
    %v598 = vld [vmem:[#allocation7 + $0x88] sm:$0xff]
    %v599 = vld [vmem:[#allocation7 + $0x90] sm:$0xff]
    %v600 = vld [vmem:[#allocation7 + $0x98] sm:$0xff]
    %v601 = vld [vmem:[#allocation7 + $0xa0] sm:$0xff]
    %v602 = vld [vmem:[#allocation7 + $0xa8] sm:$0xff]
    %v603 = vld [vmem:[#allocation7 + $0xb0] sm:$0xff]
    %v604 = vld [vmem:[#allocation7 + $0xb8] sm:$0xff]
    %v605 = vld [vmem:[#allocation7 + $0xc0] sm:$0xff]
    %v606 = vld [vmem:[#allocation7 + $0xc8] sm:$0xff]
    %v607 = vld [vmem:[#allocation7 + $0xd0] sm:$0xff]
    %v608 = vld [vmem:[#allocation7 + $0xd8] sm:$0xff]
    %v609 = vld [vmem:[#allocation7 + $0xe0] sm:$0xff]
    %v610 = vld [vmem:[#allocation7 + $0xe8] sm:$0xff]
    %v611 = vld [vmem:[#allocation7 + $0xf0] sm:$0xff]
    %v612 = vld [vmem:[#allocation7 + $0xf8] sm:$0xff]
    %v613 = vld [vmem:[#allocation7 + $0x100] sm:$0xff]
    %v614 = vld [vmem:[#allocation7 + $0x108] sm:$0xff]
    %v615 = vld [vmem:[#allocation7 + $0x110] sm:$0xff]
    %v616 = vld [vmem:[#allocation7 + $0x118] sm:$0xff]
    %v617 = vld [vmem:[#allocation7 + $0x120] sm:$0xff]
    %v618 = vld [vmem:[#allocation7 + $0x128] sm:$0xff]
    %v619 = vld [vmem:[#allocation7 + $0x130] sm:$0xff]
    %v620 = vld [vmem:[#allocation7 + $0x138] sm:$0xff]
    %v621 = vld [vmem:[#allocation7 + $0x140] sm:$0xff]
    %v622 = vld [vmem:[#allocation7 + $0x148] sm:$0xff]
    %v623 = vld [vmem:[#allocation7 + $0x150] sm:$0xff]
    %v624 = vld [vmem:[#allocation7 + $0x158] sm:$0xff]
    %v625 = vld [vmem:[#allocation7 + $0x160] sm:$0xff]
    %v626 = vld [vmem:[#allocation7 + $0x168] sm:$0xff]
    %v627 = vld [vmem:[#allocation7 + $0x170] sm:$0xff]
    %v628 = vld [vmem:[#allocation7 + $0x178] sm:$0xff]
    %v629 = vld [vmem:[#allocation7 + $0x180] sm:$0xff]
    %v630 = vld [vmem:[#allocation7 + $0x188] sm:$0xff]
    %v631 = vld [vmem:[#allocation7 + $0x190] sm:$0xff]
    %v632 = vld [vmem:[#allocation7 + $0x198] sm:$0xff]
    %v633 = vld [vmem:[#allocation7 + $0x1a0] sm:$0xff]
    %v634 = vld [vmem:[#allocation7 + $0x1a8] sm:$0xff]
    %v635 = vld [vmem:[#allocation7 + $0x1b0] sm:$0xff]
    %v636 = vld [vmem:[#allocation7 + $0x1b8] sm:$0xff]
    %v637 = vld [vmem:[#allocation7 + $0x1c0] sm:$0xff]
    %v638 = vld [vmem:[#allocation7 + $0x1c8] sm:$0xff]
    %v639 = vld [vmem:[#allocation7 + $0x1d0] sm:$0xff]
    %v640 = vld [vmem:[#allocation7 + $0x1d8] sm:$0xff]
    %v641 = vld [vmem:[#allocation7 + $0x1e0] sm:$0xff]
    %v642 = vld [vmem:[#allocation7 + $0x1e8] sm:$0xff]
    %v643 = vld [vmem:[#allocation7 + $0x1f0] sm:$0xff]
    %v644 = vld [vmem:[#allocation7 + $0x1f8] sm:$0xff]
    %645 = vmatprep.subr.mxu0 0.0
    %646 = vmatpush1.msra.mxu0 %v581
    %647 = vmatprep.subr.mxu0 0.0
    %648 = vmatpush1.msra.mxu0 %v582
    %649 = vmatprep.subr.mxu0 0.0
    %650 = vmatpush1.msra.mxu0 %v583
    %651 = vmatprep.subr.mxu0 0.0
    %652 = vmatpush1.msra.mxu0 %v584
    %653 = vmatprep.subr.mxu0 0.0
    %654 = vmatpush1.msra.mxu0 %v585
    %655 = vmatprep.subr.mxu0 0.0
    %656 = vmatpush1.msra.mxu0 %v586
    %657 = vmatprep.subr.mxu0 0.0
    %658 = vmatpush1.msra.mxu0 %v587
    %659 = vmatprep.subr.mxu0 0.0
    %660 = vmatpush1.msra.mxu0 %v588
    %661 = vmatprep.subr.mxu0 0.0
    %662 = vmatpush1.msra.mxu0 %v589
    %663 = vmatprep.subr.mxu0 0.0
    %664 = vmatpush1.msra.mxu0 %v590
    %665 = vmatprep.subr.mxu0 0.0
    %666 = vmatpush1.msra.mxu0 %v591
    %667 = vmatprep.subr.mxu0 0.0
    %668 = vmatpush1.msra.mxu0 %v592
    %669 = vmatprep.subr.mxu0 0.0
    %670 = vmatpush1.msra.mxu0 %v593
    %671 = vmatprep.subr.mxu0 0.0
    %672 = vmatpush1.msra.mxu0 %v594
    %673 = vmatprep.subr.mxu0 0.0
    %674 = vmatpush1.msra.mxu0 %v595
    %675 = vmatprep.subr.mxu0 0.0
    %676 = vmatpush1.msra.mxu0 %v596
    %677 = vmatprep.subr.mxu0 0.0
    %678 = vmatpush1.msra.mxu0 %v597
    %679 = vmatprep.subr.mxu0 0.0
    %680 = vmatpush1.msra.mxu0 %v598
    %681 = vmatprep.subr.mxu0 0.0
    %682 = vmatpush1.msra.mxu0 %v599
    %683 = vmatprep.subr.mxu0 0.0
    %684 = vmatpush1.msra.mxu0 %v600
    %685 = vmatprep.subr.mxu0 0.0
    %686 = vmatpush1.msra.mxu0 %v601
    %687 = vmatprep.subr.mxu0 0.0
    %688 = vmatpush1.msra.mxu0 %v602
    %689 = vmatprep.subr.mxu0 0.0
    %690 = vmatpush1.msra.mxu0 %v603
    %691 = vmatprep.subr.mxu0 0.0
    %692 = vmatpush1.msra.mxu0 %v604
    %693 = vmatprep.subr.mxu0 0.0
    %694 = vmatpush1.msra.mxu0 %v605
    %695 = vmatprep.subr.mxu0 0.0
    %696 = vmatpush1.msra.mxu0 %v606
    %697 = vmatprep.subr.mxu0 0.0
    %698 = vmatpush1.msra.mxu0 %v607
    %699 = vmatprep.subr.mxu0 0.0
    %700 = vmatpush1.msra.mxu0 %v608
    %701 = vmatprep.subr.mxu0 0.0
    %702 = vmatpush1.msra.mxu0 %v609
    %703 = vmatprep.subr.mxu0 0.0
    %704 = vmatpush1.msra.mxu0 %v610
    %705 = vmatprep.subr.mxu0 0.0
    %706 = vmatpush1.msra.mxu0 %v611
    %707 = vmatprep.subr.mxu0 0.0
    %708 = vmatpush1.msra.mxu0 %v612
    %709 = vmatprep.mubr.f32.mxu0 %v578
    %710 = vmatmul.mubr.f32.gmra.mrb[0].mxu0 %v577
    %v711 = vpop.f32.mrb[0].mxu0
    %v712 = vadd.f32 0.0, %v711
    %v713 = vpop.f32.mrb[0].mxu0
    %714 = vdwg.mxu0
    %715 = vmatprep.subr.mxu0 0.0
    %716 = vmatpush1.msra.mxu0 %v613
    %717 = vmatprep.subr.mxu0 0.0
    %718 = vmatpush1.msra.mxu0 %v614
    %719 = vmatprep.subr.mxu0 0.0
    %720 = vmatpush1.msra.mxu0 %v615
    %721 = vmatprep.subr.mxu0 0.0
    %722 = vmatpush1.msra.mxu0 %v616
    %723 = vmatprep.subr.mxu0 0.0
    %724 = vmatpush1.msra.mxu0 %v617
    %725 = vmatprep.subr.mxu0 0.0
    %726 = vmatpush1.msra.mxu0 %v618
    %727 = vmatprep.subr.mxu0 0.0
    %728 = vmatpush1.msra.mxu0 %v619
    %729 = vmatprep.subr.mxu0 0.0
    %730 = vmatpush1.msra.mxu0 %v620
    %731 = vmatprep.subr.mxu0 0.0
    %732 = vmatpush1.msra.mxu0 %v621
    %733 = vmatprep.subr.mxu0 0.0
    %734 = vmatpush1.msra.mxu0 %v622
    %735 = vmatprep.subr.mxu0 0.0
    %736 = vmatpush1.msra.mxu0 %v623
    %737 = vmatprep.subr.mxu0 0.0
    %738 = vmatpush1.msra.mxu0 %v624
    %739 = vmatprep.subr.mxu0 0.0
    %740 = vmatpush1.msra.mxu0 %v625
    %741 = vmatprep.subr.mxu0 0.0
    %742 = vmatpush1.msra.mxu0 %v626
    %743 = vmatprep.subr.mxu0 0.0
    %744 = vmatpush1.msra.mxu0 %v627
    %745 = vmatprep.subr.mxu0 0.0
    %746 = vmatpush1.msra.mxu0 %v628
    %747 = vmatprep.subr.mxu0 0.0
    %748 = vmatpush1.msra.mxu0 %v629
    %749 = vmatprep.subr.mxu0 0.0
    %750 = vmatpush1.msra.mxu0 %v630
    %751 = vmatprep.subr.mxu0 0.0
    %752 = vmatpush1.msra.mxu0 %v631
    %753 = vmatprep.subr.mxu0 0.0
    %754 = vmatpush1.msra.mxu0 %v632
    %755 = vmatprep.subr.mxu0 0.0
    %756 = vmatpush1.msra.mxu0 %v633
    %757 = vmatprep.subr.mxu0 0.0
    %758 = vmatpush1.msra.mxu0 %v634
    %759 = vmatprep.subr.mxu0 0.0
    %760 = vmatpush1.msra.mxu0 %v635
    %761 = vmatprep.subr.mxu0 0.0
    %762 = vmatpush1.msra.mxu0 %v636
    %763 = vmatprep.subr.mxu0 0.0
    %764 = vmatpush1.msra.mxu0 %v637
    %765 = vmatprep.subr.mxu0 0.0
    %766 = vmatpush1.msra.mxu0 %v638
    %767 = vmatprep.subr.mxu0 0.0
    %768 = vmatpush1.msra.mxu0 %v639
    %769 = vmatprep.subr.mxu0 0.0
    %770 = vmatpush1.msra.mxu0 %v640
    %771 = vmatprep.subr.mxu0 0.0
    %772 = vmatpush1.msra.mxu0 %v641
    %773 = vmatprep.subr.mxu0 0.0
    %774 = vmatpush1.msra.mxu0 %v642
    %775 = vmatprep.subr.mxu0 0.0
    %776 = vmatpush1.msra.mxu0 %v643
    %777 = vmatprep.subr.mxu0 0.0
    %778 = vmatpush1.msra.mxu0 %v644
    %779 = vmatprep.mubr.f32.mxu0 %v580
    %780 = vmatmul.mubr.f32.gmra.mrb[0].mxu0 %v579
    %v781 = vpop.f32.mrb[0].mxu0
    %v782 = vadd.f32 %v712, %v781
    %v783 = vpop.f32.mrb[0].mxu0
    %784 = vdwg.mxu0
    %v785 = vld [vmem:[%s1 + $0x8] sm:$0xff]
    %v786 = vld [vmem:[%s2 + $0x8] sm:$0xff]
    %787 = vrot.lane.b32.xlu0 %v782, 1
    %v788 = vpop.permute.xlu0 %787
    %v789 = vld [vmem:[%s6] sm:$0x1]
    %v790 = vlaneseq
    %v791 = vshrl.u32 %v790, 7
    %v792 = vsub.s32 0, %v791
    %v793 = vrot.slane %v789, %v792
    %v794 = vmul.f32 %v788, %v793
    %795 = vst [vmem:[#allocation3] sm:$0xff] %v794
    %796 = vst [vmem:[#allocation3 + $0x8] sm:$0xff] %v782
    %797 = vrot.lane.b32.xlu0 %v782, 127
    %v798 = vpop.permute.xlu0 %797
    %v799 = vld [vmem:[%s6 + $0x2] sm:$0x1]
    %v800 = vlaneseq
    %v801 = vshrl.u32 %v800, 7
    %v802 = vsub.s32 0, %v801
    %v803 = vrot.slane %v799, %v802
    %v804 = vmul.f32 %v798, %v803
    %805 = vst [vmem:[#allocation3 + $0x10] sm:$0xff] %v804
    %v806 = vld [vmem:[#allocation3] sm:$0xff]
    %v807 = vld [vmem:[#allocation3 + $0x8] sm:$0xff]
    %v808 = vld [vmem:[#allocation3 + $0x10] sm:$0xff]
    %810 = vset.pattern.permute.xlu0 0
    %811 = vperm.xlu0 %810, %v786
    %v812 = vpop.permute.xlu0 %811
    %vm814 = vcmask 195584
    %v816 = vsel %vm814, %v785, 0
    %818 = vmatprep.subr.mxu0 0.0
    %819 = vmatpush1.msra.mxu0 %v806
    %820 = vmatprep.subr.mxu0 0.0
    %821 = vmatpush1.msra.mxu0 %v807
    %822 = vmatprep.subr.mxu0 0.0
    %823 = vmatpush1.msra.mxu0 %v808
    %824 = vmatprep.subr.mxu0 0.0
    %825 = vmatpush1.msra.mxu0 0.0
    %826 = vmatprep.subr.mxu0 0.0
    %827 = vmatpush1.msra.mxu0 0.0
    %828 = vmatprep.subr.mxu0 0.0
    %829 = vmatpush1.msra.mxu0 0.0
    %830 = vmatprep.subr.mxu0 0.0
    %831 = vmatpush1.msra.mxu0 0.0
    %832 = vmatprep.subr.mxu0 0.0
    %833 = vmatpush1.msra.mxu0 0.0
    %834 = vmatprep.subr.mxu0 0.0
    %835 = vmatpush1.msra.mxu0 0.0
    %836 = vmatprep.subr.mxu0 0.0
    %837 = vmatpush1.msra.mxu0 0.0
    %838 = vmatprep.subr.mxu0 0.0
    %839 = vmatpush1.msra.mxu0 0.0
    %840 = vmatprep.subr.mxu0 0.0
    %841 = vmatpush1.msra.mxu0 0.0
    %842 = vmatprep.subr.mxu0 0.0
    %843 = vmatpush1.msra.mxu0 0.0
    %844 = vmatprep.subr.mxu0 0.0
    %845 = vmatpush1.msra.mxu0 0.0
    %846 = vmatprep.subr.mxu0 0.0
    %847 = vmatpush1.msra.mxu0 0.0
    %848 = vmatprep.subr.mxu0 0.0
    %849 = vmatpush1.msra.mxu0 0.0
    %850 = vmatprep.subr.mxu0 0.0
    %851 = vmatpush1.msra.mxu0 0.0
    %852 = vmatprep.subr.mxu0 0.0
    %853 = vmatpush1.msra.mxu0 0.0
    %854 = vmatprep.subr.mxu0 0.0
    %855 = vmatpush1.msra.mxu0 0.0
    %856 = vmatprep.subr.mxu0 0.0
    %857 = vmatpush1.msra.mxu0 0.0
    %858 = vmatprep.subr.mxu0 0.0
    %859 = vmatpush1.msra.mxu0 0.0
    %860 = vmatprep.subr.mxu0 0.0
    %861 = vmatpush1.msra.mxu0 0.0
    %862 = vmatprep.subr.mxu0 0.0
    %863 = vmatpush1.msra.mxu0 0.0
    %864 = vmatprep.subr.mxu0 0.0
    %865 = vmatpush1.msra.mxu0 0.0
    %866 = vmatprep.subr.mxu0 0.0
    %867 = vmatpush1.msra.mxu0 0.0
    %868 = vmatprep.subr.mxu0 0.0
    %869 = vmatpush1.msra.mxu0 0.0
    %870 = vmatprep.subr.mxu0 0.0
    %871 = vmatpush1.msra.mxu0 0.0
    %872 = vmatprep.subr.mxu0 0.0
    %873 = vmatpush1.msra.mxu0 0.0
    %874 = vmatprep.subr.mxu0 0.0
    %875 = vmatpush1.msra.mxu0 0.0
    %876 = vmatprep.subr.mxu0 0.0
    %877 = vmatpush1.msra.mxu0 0.0
    %878 = vmatprep.subr.mxu0 0.0
    %879 = vmatpush1.msra.mxu0 0.0
    %880 = vmatprep.subr.mxu0 0.0
    %881 = vmatpush1.msra.mxu0 0.0
    %882 = vmatprep.mubr.f32.mxu0 0.0
    %883 = vmatmul.mubr.f32.gmra.mrb[0].mxu0 %v816
    %v884 = vpop.f32.mrb[0].mxu0
    %v885 = vadd.f32 %v812, %v884
    %v886 = vpop.f32.mrb[0].mxu0
    %887 = vdwg.mxu0
    %v888 = vmax.f32 %v885, 0.0
    %v889 = vld [vmem:[%s1 + $0x10] sm:$0xff]
    %v890 = vld [vmem:[%s2 + $0x10] sm:$0xff]
    %891 = vrot.lane.b32.xlu0 %v888, 1
    %v892 = vpop.permute.xlu0 %891
    %v893 = vld [vmem:[%s6] sm:$0x1]
    %v894 = vlaneseq
    %v895 = vshrl.u32 %v894, 7
    %v896 = vsub.s32 0, %v895
    %v897 = vrot.slane %v893, %v896
    %v898 = vmul.f32 %v892, %v897
    %899 = vst [vmem:[#allocation4] sm:$0xff] %v898
    %900 = vst [vmem:[#allocation4 + $0x8] sm:$0xff] %v888
    %901 = vrot.lane.b32.xlu0 %v888, 127
    %v902 = vpop.permute.xlu0 %901
    %v903 = vld [vmem:[%s6 + $0x2] sm:$0x1]
    %v904 = vlaneseq
    %v905 = vshrl.u32 %v904, 7
    %v906 = vsub.s32 0, %v905
    %v907 = vrot.slane %v903, %v906
    %v908 = vmul.f32 %v902, %v907
    %909 = vst [vmem:[#allocation4 + $0x10] sm:$0xff] %v908
    %v910 = vld [vmem:[#allocation4] sm:$0xff]
    %v911 = vld [vmem:[#allocation4 + $0x8] sm:$0xff]
    %v912 = vld [vmem:[#allocation4 + $0x10] sm:$0xff]
    %914 = vset.pattern.permute.xlu0 0
    %915 = vperm.xlu0 %914, %v890
    %v916 = vpop.permute.xlu0 %915
    %v919 = vsel %vm814, %v889, 0
    %921 = vmatprep.subr.mxu0 0.0
    %922 = vmatpush1.msra.mxu0 %v910
    %923 = vmatprep.subr.mxu0 0.0
    %924 = vmatpush1.msra.mxu0 %v911
    %925 = vmatprep.subr.mxu0 0.0
    %926 = vmatpush1.msra.mxu0 %v912
    %927 = vmatprep.subr.mxu0 0.0
    %928 = vmatpush1.msra.mxu0 0.0
    %929 = vmatprep.subr.mxu0 0.0
    %930 = vmatpush1.msra.mxu0 0.0
    %931 = vmatprep.subr.mxu0 0.0
    %932 = vmatpush1.msra.mxu0 0.0
    %933 = vmatprep.subr.mxu0 0.0
    %934 = vmatpush1.msra.mxu0 0.0
    %935 = vmatprep.subr.mxu0 0.0
    %936 = vmatpush1.msra.mxu0 0.0
    %937 = vmatprep.subr.mxu0 0.0
    %938 = vmatpush1.msra.mxu0 0.0
    %939 = vmatprep.subr.mxu0 0.0
    %940 = vmatpush1.msra.mxu0 0.0
    %941 = vmatprep.subr.mxu0 0.0
    %942 = vmatpush1.msra.mxu0 0.0
    %943 = vmatprep.subr.mxu0 0.0
    %944 = vmatpush1.msra.mxu0 0.0
    %945 = vmatprep.subr.mxu0 0.0
    %946 = vmatpush1.msra.mxu0 0.0
    %947 = vmatprep.subr.mxu0 0.0
    %948 = vmatpush1.msra.mxu0 0.0
    %949 = vmatprep.subr.mxu0 0.0
    %950 = vmatpush1.msra.mxu0 0.0
    %951 = vmatprep.subr.mxu0 0.0
    %952 = vmatpush1.msra.mxu0 0.0
    %953 = vmatprep.subr.mxu0 0.0
    %954 = vmatpush1.msra.mxu0 0.0
    %955 = vmatprep.subr.mxu0 0.0
    %956 = vmatpush1.msra.mxu0 0.0
    %957 = vmatprep.subr.mxu0 0.0
    %958 = vmatpush1.msra.mxu0 0.0
    %959 = vmatprep.subr.mxu0 0.0
    %960 = vmatpush1.msra.mxu0 0.0
    %961 = vmatprep.subr.mxu0 0.0
    %962 = vmatpush1.msra.mxu0 0.0
    %963 = vmatprep.subr.mxu0 0.0
    %964 = vmatpush1.msra.mxu0 0.0
    %965 = vmatprep.subr.mxu0 0.0
    %966 = vmatpush1.msra.mxu0 0.0
    %967 = vmatprep.subr.mxu0 0.0
    %968 = vmatpush1.msra.mxu0 0.0
    %969 = vmatprep.subr.mxu0 0.0
    %970 = vmatpush1.msra.mxu0 0.0
    %971 = vmatprep.subr.mxu0 0.0
    %972 = vmatpush1.msra.mxu0 0.0
    %973 = vmatprep.subr.mxu0 0.0
    %974 = vmatpush1.msra.mxu0 0.0
    %975 = vmatprep.subr.mxu0 0.0
    %976 = vmatpush1.msra.mxu0 0.0
    %977 = vmatprep.subr.mxu0 0.0
    %978 = vmatpush1.msra.mxu0 0.0
    %979 = vmatprep.subr.mxu0 0.0
    %980 = vmatpush1.msra.mxu0 0.0
    %981 = vmatprep.subr.mxu0 0.0
    %982 = vmatpush1.msra.mxu0 0.0
    %983 = vmatprep.subr.mxu0 0.0
    %984 = vmatpush1.msra.mxu0 0.0
    %985 = vmatprep.mubr.f32.mxu0 0.0
    %986 = vmatmul.mubr.f32.gmra.mrb[0].mxu0 %v919
    %v987 = vpop.f32.mrb[0].mxu0
    %v988 = vadd.f32 %v916, %v987
    %v989 = vpop.f32.mrb[0].mxu0
    %990 = vdwg.mxu0
    %v991 = vld [vmem:[%s2 + $0x18] sm:$0xff]
    %v992 = vld [vmem:[%s2 + $0x20] sm:$0xff]
    %v993 = vadd.f32 %v988, %v782
    %995 = vset.pattern.permute.xlu0 0
    %996 = vperm.xlu0 %995, %v991
    %v997 = vpop.permute.xlu0 %996
    %v999 = vmul.f32 %v993, %v997
    %1001 = vset.pattern.permute.xlu0 0
    %1002 = vperm.xlu0 %1001, %v992
    %v1003 = vpop.permute.xlu0 %1002
    %v1005 = vadd.f32 %v999, %v1003
    %v1006 = vmax.f32 %v1005, 0.0
    %v1007 = vld [vmem:[%s1 + $0x18] sm:$0xff]
    %v1008 = vld [vmem:[%s1 + $0x20] sm:$0xff]
    %v1009 = vld [vmem:[%s2 + $0x28] sm:$0xff]
    %v1010 = vld [vmem:[%s2 + $0x30] sm:$0xff]
    %1011 = vrot.lane.b32.xlu0 %v1006, 1
    %v1012 = vpop.permute.xlu0 %1011
    %v1013 = vld [vmem:[%s6] sm:$0x1]
    %v1014 = vlaneseq
    %v1015 = vshrl.u32 %v1014, 7
    %v1016 = vsub.s32 0, %v1015
    %v1017 = vrot.slane %v1013, %v1016
    %v1018 = vmul.f32 %v1012, %v1017
    %1019 = vst [vmem:[#allocation5] sm:$0xff] %v1018
    %1020 = vst [vmem:[#allocation5 + $0x8] sm:$0xff] %v1006
    %1021 = vrot.lane.b32.xlu0 %v1006, 127
    %v1022 = vpop.permute.xlu0 %1021
    %v1023 = vld [vmem:[%s6 + $0x2] sm:$0x1]
    %v1024 = vlaneseq
    %v1025 = vshrl.u32 %v1024, 7
    %v1026 = vsub.s32 0, %v1025
    %v1027 = vrot.slane %v1023, %v1026
    %v1028 = vmul.f32 %v1022, %v1027
    %1029 = vst [vmem:[#allocation5 + $0x10] sm:$0xff] %v1028
    %v1030 = vld [vmem:[#allocation5] sm:$0xff]
    %v1031 = vld [vmem:[#allocation5 + $0x8] sm:$0xff]
    %v1032 = vld [vmem:[#allocation5 + $0x10] sm:$0xff]
    %1034 = vset.pattern.permute.xlu0 0
    %1035 = vperm.xlu0 %1034, %v1009
    %v1036 = vpop.permute.xlu0 %1035
    %1039 = vset.pattern.permute.xlu0 0
    %1040 = vperm.xlu0 %1039, %v1010
    %v1041 = vpop.permute.xlu0 %1040
    %v1044 = vsel %vm814, %v1007, 0
    %v1047 = vsel %vm814, %v1008, 0
    %1049 = vmatprep.subr.mxu0 0.0
    %1050 = vmatpush1.msra.mxu0 %v1030
    %1051 = vmatprep.subr.mxu0 0.0
    %1052 = vmatpush1.msra.mxu0 %v1031
    %1053 = vmatprep.subr.mxu0 0.0
    %1054 = vmatpush1.msra.mxu0 %v1032
    %1055 = vmatprep.subr.mxu0 0.0
    %1056 = vmatpush1.msra.mxu0 0.0
    %1057 = vmatprep.subr.mxu0 0.0
    %1058 = vmatpush1.msra.mxu0 0.0
    %1059 = vmatprep.subr.mxu0 0.0
    %1060 = vmatpush1.msra.mxu0 0.0
    %1061 = vmatprep.subr.mxu0 0.0
    %1062 = vmatpush1.msra.mxu0 0.0
    %1063 = vmatprep.subr.mxu0 0.0
    %1064 = vmatpush1.msra.mxu0 0.0
    %1065 = vmatprep.subr.mxu0 0.0
    %1066 = vmatpush1.msra.mxu0 0.0
    %1067 = vmatprep.subr.mxu0 0.0
    %1068 = vmatpush1.msra.mxu0 0.0
    %1069 = vmatprep.subr.mxu0 0.0
    %1070 = vmatpush1.msra.mxu0 0.0
    %1071 = vmatprep.subr.mxu0 0.0
    %1072 = vmatpush1.msra.mxu0 0.0
    %1073 = vmatprep.subr.mxu0 0.0
    %1074 = vmatpush1.msra.mxu0 0.0
    %1075 = vmatprep.subr.mxu0 0.0
    %1076 = vmatpush1.msra.mxu0 0.0
    %1077 = vmatprep.subr.mxu0 0.0
    %1078 = vmatpush1.msra.mxu0 0.0
    %1079 = vmatprep.subr.mxu0 0.0
    %1080 = vmatpush1.msra.mxu0 0.0
    %1081 = vmatprep.subr.mxu0 0.0
    %1082 = vmatpush1.msra.mxu0 0.0
    %1083 = vmatprep.subr.mxu0 0.0
    %1084 = vmatpush1.msra.mxu0 0.0
    %1085 = vmatprep.subr.mxu0 0.0
    %1086 = vmatpush1.msra.mxu0 0.0
    %1087 = vmatprep.subr.mxu0 0.0
    %1088 = vmatpush1.msra.mxu0 0.0
    %1089 = vmatprep.subr.mxu0 0.0
    %1090 = vmatpush1.msra.mxu0 0.0
    %1091 = vmatprep.subr.mxu0 0.0
    %1092 = vmatpush1.msra.mxu0 0.0
    %1093 = vmatprep.subr.mxu0 0.0
    %1094 = vmatpush1.msra.mxu0 0.0
    %1095 = vmatprep.subr.mxu0 0.0
    %1096 = vmatpush1.msra.mxu0 0.0
    %1097 = vmatprep.subr.mxu0 0.0
    %1098 = vmatpush1.msra.mxu0 0.0
    %1099 = vmatprep.subr.mxu0 0.0
    %1100 = vmatpush1.msra.mxu0 0.0
    %1101 = vmatprep.subr.mxu0 0.0
    %1102 = vmatpush1.msra.mxu0 0.0
    %1103 = vmatprep.subr.mxu0 0.0
    %1104 = vmatpush1.msra.mxu0 0.0
    %1105 = vmatprep.subr.mxu0 0.0
    %1106 = vmatpush1.msra.mxu0 0.0
    %1107 = vmatprep.subr.mxu0 0.0
    %1108 = vmatpush1.msra.mxu0 0.0
    %1109 = vmatprep.subr.mxu0 0.0
    %1110 = vmatpush1.msra.mxu0 0.0
    %1111 = vmatprep.subr.mxu0 0.0
    %1112 = vmatpush1.msra.mxu0 0.0
    %1113 = vmatprep.mubr.f32.mxu0 0.0
    %1114 = vmatmul.mubr.f32.gmra.mrb[0].mxu0 %v1044
    %v1115 = vpop.f32.mrb[0].mxu0
    %v1116 = vadd.f32 %v1036, %v1115
    %v1117 = vpop.f32.mrb[0].mxu0
    %1118 = vmatprep.mubr.f32.mxu0 0.0
    %1119 = vmatmul.mubr.f32.gmra.mrb[0].mxu0 %v1047
    %v1120 = vpop.f32.mrb[0].mxu0
    %v1121 = vadd.f32 %v1041, %v1120
    %v1122 = vpop.f32.mrb[0].mxu0
    %1123 = vdwg.mxu0
    %v1124 = vmax.f32 %v1116, 0.0
    %v1125 = vmax.f32 %v1121, 0.0
    %v1126 = vld [vmem:[%s1 + $0x28] sm:$0xff]
    %v1127 = vld [vmem:[%s1 + $0x30] sm:$0xff]
    %v1128 = vld [vmem:[%s2 + $0x38] sm:$0xff]
    %v1129 = vld [vmem:[%s2 + $0x40] sm:$0xff]
    %1130 = vrot.lane.b32.xlu0 %v1124, 1
    %v1131 = vpop.permute.xlu0 %1130
    %1132 = vrot.lane.b32.xlu0 %v1125, 1
    %v1133 = vpop.permute.xlu0 %1132
    %v1134 = vld [vmem:[%s6] sm:$0x1]
    %v1135 = vlaneseq
    %v1136 = vshrl.u32 %v1135, 7
    %v1137 = vsub.s32 0, %v1136
    %v1138 = vrot.slane %v1134, %v1137
    %v1139 = vmul.f32 %v1131, %v1138
    %v1140 = vmul.f32 %v1133, %v1138
    %1141 = vst [vmem:[#allocation6] sm:$0xff] %v1139
    %1142 = vst [vmem:[#allocation6 + $0x8] sm:$0xff] %v1140
    %1143 = vst [vmem:[#allocation6 + $0x10] sm:$0xff] %v1124
    %1144 = vst [vmem:[#allocation6 + $0x18] sm:$0xff] %v1125
    %1145 = vrot.lane.b32.xlu0 %v1124, 127
    %v1146 = vpop.permute.xlu0 %1145
    %1147 = vrot.lane.b32.xlu0 %v1125, 127
    %v1148 = vpop.permute.xlu0 %1147
    %v1149 = vld [vmem:[%s6 + $0x2] sm:$0x1]
    %v1150 = vlaneseq
    %v1151 = vshrl.u32 %v1150, 7
    %v1152 = vsub.s32 0, %v1151
    %v1153 = vrot.slane %v1149, %v1152
    %v1154 = vmul.f32 %v1146, %v1153
    %v1155 = vmul.f32 %v1148, %v1153
    %1156 = vst [vmem:[#allocation6 + $0x20] sm:$0xff] %v1154
    %1157 = vst [vmem:[#allocation6 + $0x28] sm:$0xff] %v1155
    %v1158 = vld [vmem:[#allocation6] sm:$0xff]
    %v1159 = vld [vmem:[#allocation6 + $0x8] sm:$0xff]
    %v1160 = vld [vmem:[#allocation6 + $0x10] sm:$0xff]
    %v1161 = vld [vmem:[#allocation6 + $0x18] sm:$0xff]
    %v1162 = vld [vmem:[#allocation6 + $0x20] sm:$0xff]
    %v1163 = vld [vmem:[#allocation6 + $0x28] sm:$0xff]
    %1165 = vset.pattern.permute.xlu0 0
    %1166 = vperm.xlu0 %1165, %v1128
    %v1167 = vpop.permute.xlu0 %1166
    %1170 = vset.pattern.permute.xlu0 0
    %1171 = vperm.xlu0 %1170, %v1129
    %v1172 = vpop.permute.xlu0 %1171
    %vm1174 = vcmask 392192
    %v1176 = vsel %vm1174, %v1126, 0
    %v1179 = vsel %vm1174, %v1127, 0
    %1181 = vmatprep.subr.mxu0 0.0
    %1182 = vmatpush1.msra.mxu0 %v1158
    %1183 = vmatprep.subr.mxu0 0.0
    %1184 = vmatpush1.msra.mxu0 %v1159
    %1185 = vmatprep.subr.mxu0 0.0
    %1186 = vmatpush1.msra.mxu0 %v1160
    %1187 = vmatprep.subr.mxu0 0.0
    %1188 = vmatpush1.msra.mxu0 %v1161
    %1189 = vmatprep.subr.mxu0 0.0
    %1190 = vmatpush1.msra.mxu0 %v1162
    %1191 = vmatprep.subr.mxu0 0.0
    %1192 = vmatpush1.msra.mxu0 %v1163
    %1193 = vmatprep.subr.mxu0 0.0
    %1194 = vmatpush1.msra.mxu0 0.0
    %1195 = vmatprep.subr.mxu0 0.0
    %1196 = vmatpush1.msra.mxu0 0.0
    %1197 = vmatprep.subr.mxu0 0.0
    %1198 = vmatpush1.msra.mxu0 0.0
    %1199 = vmatprep.subr.mxu0 0.0
    %1200 = vmatpush1.msra.mxu0 0.0
    %1201 = vmatprep.subr.mxu0 0.0
    %1202 = vmatpush1.msra.mxu0 0.0
    %1203 = vmatprep.subr.mxu0 0.0
    %1204 = vmatpush1.msra.mxu0 0.0
    %1205 = vmatprep.subr.mxu0 0.0
    %1206 = vmatpush1.msra.mxu0 0.0
    %1207 = vmatprep.subr.mxu0 0.0
    %1208 = vmatpush1.msra.mxu0 0.0
    %1209 = vmatprep.subr.mxu0 0.0
    %1210 = vmatpush1.msra.mxu0 0.0
    %1211 = vmatprep.subr.mxu0 0.0
    %1212 = vmatpush1.msra.mxu0 0.0
    %1213 = vmatprep.subr.mxu0 0.0
    %1214 = vmatpush1.msra.mxu0 0.0
    %1215 = vmatprep.subr.mxu0 0.0
    %1216 = vmatpush1.msra.mxu0 0.0
    %1217 = vmatprep.subr.mxu0 0.0
    %1218 = vmatpush1.msra.mxu0 0.0
    %1219 = vmatprep.subr.mxu0 0.0
    %1220 = vmatpush1.msra.mxu0 0.0
    %1221 = vmatprep.subr.mxu0 0.0
    %1222 = vmatpush1.msra.mxu0 0.0
    %1223 = vmatprep.subr.mxu0 0.0
    %1224 = vmatpush1.msra.mxu0 0.0
    %1225 = vmatprep.subr.mxu0 0.0
    %1226 = vmatpush1.msra.mxu0 0.0
    %1227 = vmatprep.subr.mxu0 0.0
    %1228 = vmatpush1.msra.mxu0 0.0
    %1229 = vmatprep.subr.mxu0 0.0
    %1230 = vmatpush1.msra.mxu0 0.0
    %1231 = vmatprep.subr.mxu0 0.0
    %1232 = vmatpush1.msra.mxu0 0.0
    %1233 = vmatprep.subr.mxu0 0.0
    %1234 = vmatpush1.msra.mxu0 0.0
    %1235 = vmatprep.subr.mxu0 0.0
    %1236 = vmatpush1.msra.mxu0 0.0
    %1237 = vmatprep.subr.mxu0 0.0
    %1238 = vmatpush1.msra.mxu0 0.0
    %1239 = vmatprep.subr.mxu0 0.0
    %1240 = vmatpush1.msra.mxu0 0.0
    %1241 = vmatprep.subr.mxu0 0.0
    %1242 = vmatpush1.msra.mxu0 0.0
    %1243 = vmatprep.subr.mxu0 0.0
    %1244 = vmatpush1.msra.mxu0 0.0
    %1245 = vmatprep.mubr.f32.mxu0 0.0
    %1246 = vmatmul.mubr.f32.gmra.mrb[0].mxu0 %v1176
    %v1247 = vpop.f32.mrb[0].mxu0
    %v1248 = vadd.f32 %v1167, %v1247
    %v1249 = vpop.f32.mrb[0].mxu0
    %1250 = vmatprep.mubr.f32.mxu0 0.0
    %1251 = vmatmul.mubr.f32.gmra.mrb[0].mxu0 %v1179
    %v1252 = vpop.f32.mrb[0].mxu0
    %v1253 = vadd.f32 %v1172, %v1252
    %v1254 = vpop.f32.mrb[0].mxu0
    %1255 = vdwg.mxu0
    %v1256 = vld [vmem:[%s2 + $0x48] sm:$0xff]
    %v1257 = vld [vmem:[%s2 + $0x50] sm:$0xff]
    %v1258 = vld [vmem:[%s2 + $0x58] sm:$0xff]
    %v1259 = vld [vmem:[%s2 + $0x60] sm:$0xff]
    %v1260 = vadd.f32 %v1248, %v1006
    %v1261 = vadd.f32 %v1253, %v1006
    %1263 = vset.pattern.permute.xlu0 0
    %1264 = vperm.xlu0 %1263, %v1256
    %v1265 = vpop.permute.xlu0 %1264
    %1268 = vset.pattern.permute.xlu0 0
    %1269 = vperm.xlu0 %1268, %v1257
    %v1270 = vpop.permute.xlu0 %1269
    %v1272 = vmul.f32 %v1260, %v1265
    %v1273 = vmul.f32 %v1261, %v1270
    %1275 = vset.pattern.permute.xlu0 0
    %1276 = vperm.xlu0 %1275, %v1258
    %v1277 = vpop.permute.xlu0 %1276
    %1280 = vset.pattern.permute.xlu0 0
    %1281 = vperm.xlu0 %1280, %v1259
    %v1282 = vpop.permute.xlu0 %1281
    %v1284 = vadd.f32 %v1272, %v1277
    %v1285 = vadd.f32 %v1273, %v1282
    %v1286 = vmax.f32 %v1284, 0.0
    %v1287 = vmax.f32 %v1285, 0.0
    %1288 = vrot.lane.b32.xlu0 %v1286, 1
    %v1289 = vpop.permute.xlu0 %1288
    %1290 = vrot.lane.b32.xlu0 %v1287, 1
    %v1291 = vpop.permute.xlu0 %1290
    %v1292 = vmax.f32 %v1286, %v1289
    %v1293 = vmax.f32 %v1287, %v1291
    %1294 = vrot.lane.b32.xlu0 %v1286, 2
    %v1295 = vpop.permute.xlu0 %1294
    %1296 = vrot.lane.b32.xlu0 %v1287, 2
    %v1297 = vpop.permute.xlu0 %1296
    %v1298 = vmax.f32 %v1292, %v1295
    %v1299 = vmax.f32 %v1293, %v1297
    %1300 = vrot.lane.b32.xlu0 %v1286, 3
    %v1301 = vpop.permute.xlu0 %1300
    %1302 = vrot.lane.b32.xlu0 %v1287, 3
    %v1303 = vpop.permute.xlu0 %1302
    %v1304 = vmax.f32 %v1298, %v1301
    %v1305 = vmax.f32 %v1299, %v1303
    %v1306 = vld [vmem:[%s8] sm:$0xff]
    %v1307 = vld [vmem:[%s8 + $0x8] sm:$0xff]
    %v1308 = vld [vmem:[%s8 + $0x10] sm:$0xff]
    %v1309 = vld [vmem:[%s8 + $0x18] sm:$0xff]
    %v1310 = vld [vmem:[%s8 + $0x20] sm:$0xff]
    %v1311 = vld [vmem:[%s8 + $0x28] sm:$0xff]
    %v1312 = vld [vmem:[%s8 + $0x30] sm:$0xff]
    %v1313 = vld [vmem:[%s8 + $0x38] sm:$0xff]
    %v1314 = vld [vmem:[%s8 + $0x40] sm:$0xff]
    %v1315 = vld [vmem:[%s8 + $0x48] sm:$0xff]
    %v1316 = vld [vmem:[%s8 + $0x50] sm:$0xff]
    %v1317 = vld [vmem:[%s8 + $0x58] sm:$0xff]
    %v1318 = vld [vmem:[%s8 + $0x60] sm:$0xff]
    %v1319 = vld [vmem:[%s8 + $0x68] sm:$0xff]
    %v1320 = vld [vmem:[%s8 + $0x70] sm:$0xff]
    %v1321 = vld [vmem:[%s8 + $0x78] sm:$0xff]
    %1322 = vmatprep.subr.mxu0 0.0
    %1323 = vmatpush1.msra.mxu0 %v1306
    %1324 = vmatprep.subr.mxu0 0.0
    %1325 = vmatpush1.msra.mxu0 %v1307
    %1326 = vmatprep.subr.mxu0 0.0
    %1327 = vmatpush1.msra.mxu0 %v1308
    %1328 = vmatprep.subr.mxu0 0.0
    %1329 = vmatpush1.msra.mxu0 %v1309
    %1330 = vmatprep.subr.mxu0 0.0
    %1331 = vmatpush1.msra.mxu0 %v1310
    %1332 = vmatprep.subr.mxu0 0.0
    %1333 = vmatpush1.msra.mxu0 %v1311
    %1334 = vmatprep.subr.mxu0 0.0
    %1335 = vmatpush1.msra.mxu0 %v1312
    %1336 = vmatprep.subr.mxu0 0.0
    %1337 = vmatpush1.msra.mxu0 %v1313
    %1338 = vmatprep.subr.mxu0 0.0
    %1339 = vmatpush1.msra.mxu0 %v1314
    %1340 = vmatprep.subr.mxu0 0.0
    %1341 = vmatpush1.msra.mxu0 %v1315
    %1342 = vmatprep.subr.mxu0 0.0
    %1343 = vmatpush1.msra.mxu0 %v1316
    %1344 = vmatprep.subr.mxu0 0.0
    %1345 = vmatpush1.msra.mxu0 %v1317
    %1346 = vmatprep.subr.mxu0 0.0
    %1347 = vmatpush1.msra.mxu0 %v1318
    %1348 = vmatprep.subr.mxu0 0.0
    %1349 = vmatpush1.msra.mxu0 %v1319
    %1350 = vmatprep.subr.mxu0 0.0
    %1351 = vmatpush1.msra.mxu0 %v1320
    %1352 = vmatprep.subr.mxu0 0.0
    %1353 = vmatpush1.msra.mxu0 %v1321
    %1354 = vmatprep.subr.mxu0 0.0
    %1355 = vmatpush1.msra.mxu0 0.0
    %1356 = vmatprep.subr.mxu0 0.0
    %1357 = vmatpush1.msra.mxu0 0.0
    %1358 = vmatprep.subr.mxu0 0.0
    %1359 = vmatpush1.msra.mxu0 0.0
    %1360 = vmatprep.subr.mxu0 0.0
    %1361 = vmatpush1.msra.mxu0 0.0
    %1362 = vmatprep.subr.mxu0 0.0
    %1363 = vmatpush1.msra.mxu0 0.0
    %1364 = vmatprep.subr.mxu0 0.0
    %1365 = vmatpush1.msra.mxu0 0.0
    %1366 = vmatprep.subr.mxu0 0.0
    %1367 = vmatpush1.msra.mxu0 0.0
    %1368 = vmatprep.subr.mxu0 0.0
    %1369 = vmatpush1.msra.mxu0 0.0
    %1370 = vmatprep.subr.mxu0 0.0
    %1371 = vmatpush1.msra.mxu0 0.0
    %1372 = vmatprep.subr.mxu0 0.0
    %1373 = vmatpush1.msra.mxu0 0.0
    %1374 = vmatprep.subr.mxu0 0.0
    %1375 = vmatpush1.msra.mxu0 0.0
    %1376 = vmatprep.subr.mxu0 0.0
    %1377 = vmatpush1.msra.mxu0 0.0
    %1378 = vmatprep.subr.mxu0 0.0
    %1379 = vmatpush1.msra.mxu0 0.0
    %1380 = vmatprep.subr.mxu0 0.0
    %1381 = vmatpush1.msra.mxu0 0.0
    %1382 = vmatprep.subr.mxu0 0.0
    %1383 = vmatpush1.msra.mxu0 0.0
    %1384 = vmatprep.subr.mxu0 0.0
    %1385 = vmatpush1.msra.mxu0 0.0
    %1386 = vmatprep.mubr.f32.mxu0 0.0
    %1387 = vmatmul.mubr.f32.gmra.mrb[0].mxu0 %v1304
    %v1388 = vpop.f32.mrb[0].mxu0
    %v1389 = vadd.f32 0.0, %v1388
    %v1390 = vpop.f32.mrb[0].mxu0
    %1391 = vmatprep.mubr.f32.mxu0 0.0
    %1392 = vmatmul.mubr.f32.gmra.mrb[0].mxu0 %v1305
    %v1393 = vpop.f32.mrb[0].mxu0
    %v1394 = vadd.f32 0.0, %v1393
    %v1395 = vpop.f32.mrb[0].mxu0
    %1396 = vdwg.mxu0
    %v1397 = vld [vmem:[%s9] sm:$0x3]
    %vm1398 = vcmask 261120
    %v1400 = vsel %vm1398, %v1397, 0
    %v1403 = vsel %vm1398, %v1389, 0
    %v1406 = vsel %vm1398, %v1394, 0
    %1408 = vmatprep.subr.mxu0 0.0
    %1409 = vmatpush1.xpose.msra.mxu0 %v1403
    %1410 = vmatprep.subr.mxu0 0.0
    %1411 = vmatpush1.xpose.msra.mxu0 %v1406
    %1412 = vmatprep.subr.mxu0 0.0
    %1413 = vmatpush1.xpose.msra.mxu0 0.0
    %1414 = vmatprep.subr.mxu0 0.0
    %1415 = vmatpush1.xpose.msra.mxu0 0.0
    %1416 = vmatprep.subr.mxu0 0.0
    %1417 = vmatpush1.xpose.msra.mxu0 0.0
    %1418 = vmatprep.subr.mxu0 0.0
    %1419 = vmatpush1.xpose.msra.mxu0 0.0
    %1420 = vmatprep.subr.mxu0 0.0
    %1421 = vmatpush1.xpose.msra.mxu0 0.0
    %1422 = vmatprep.subr.mxu0 0.0
    %1423 = vmatpush1.xpose.msra.mxu0 0.0
    %1424 = vmatprep.subr.mxu0 0.0
    %1425 = vmatpush1.xpose.msra.mxu0 0.0
    %1426 = vmatprep.subr.mxu0 0.0
    %1427 = vmatpush1.xpose.msra.mxu0 0.0
    %1428 = vmatprep.subr.mxu0 0.0
    %1429 = vmatpush1.xpose.msra.mxu0 0.0
    %1430 = vmatprep.subr.mxu0 0.0
    %1431 = vmatpush1.xpose.msra.mxu0 0.0
    %1432 = vmatprep.subr.mxu0 0.0
    %1433 = vmatpush1.xpose.msra.mxu0 0.0
    %1434 = vmatprep.subr.mxu0 0.0
    %1435 = vmatpush1.xpose.msra.mxu0 0.0
    %1436 = vmatprep.subr.mxu0 0.0
    %1437 = vmatpush1.xpose.msra.mxu0 0.0
    %1438 = vmatprep.subr.mxu0 0.0
    %1439 = vmatpush1.xpose.msra.mxu0 0.0
    %1440 = vmatprep.subr.mxu0 0.0
    %1441 = vmatpush1.xpose.msra.mxu0 0.0
    %1442 = vmatprep.subr.mxu0 0.0
    %1443 = vmatpush1.xpose.msra.mxu0 0.0
    %1444 = vmatprep.subr.mxu0 0.0
    %1445 = vmatpush1.xpose.msra.mxu0 0.0
    %1446 = vmatprep.subr.mxu0 0.0
    %1447 = vmatpush1.xpose.msra.mxu0 0.0
    %1448 = vmatprep.subr.mxu0 0.0
    %1449 = vmatpush1.xpose.msra.mxu0 0.0
    %1450 = vmatprep.subr.mxu0 0.0
    %1451 = vmatpush1.xpose.msra.mxu0 0.0
    %1452 = vmatprep.subr.mxu0 0.0
    %1453 = vmatpush1.xpose.msra.mxu0 0.0
    %1454 = vmatprep.subr.mxu0 0.0
    %1455 = vmatpush1.xpose.msra.mxu0 0.0
    %1456 = vmatprep.subr.mxu0 0.0
    %1457 = vmatpush1.xpose.msra.mxu0 0.0
    %1458 = vmatprep.subr.mxu0 0.0
    %1459 = vmatpush1.xpose.msra.mxu0 0.0
    %1460 = vmatprep.subr.mxu0 0.0
    %1461 = vmatpush1.xpose.msra.mxu0 0.0
    %1462 = vmatprep.subr.mxu0 0.0
    %1463 = vmatpush1.xpose.msra.mxu0 0.0
    %1464 = vmatprep.subr.mxu0 0.0
    %1465 = vmatpush1.xpose.msra.mxu0 0.0
    %1466 = vmatprep.subr.mxu0 0.0
    %1467 = vmatpush1.xpose.msra.mxu0 0.0
    %1468 = vmatprep.subr.mxu0 0.0
    %1469 = vmatpush1.xpose.msra.mxu0 0.0
    %1470 = vmatprep.subr.mxu0 0.0
    %1471 = vmatpush1.xpose.msra.mxu0 0.0
    %1472 = vmatprep.mubr.f32.mxu0 0.0
    %1473 = vmatmul.mubr.f32.gmra.mrb[0].mxu0 %v1400
    %v1474 = vpop.f32.mrb[0].mxu0
    %v1475 = vadd.f32 0.0, %v1474
    %v1476 = vpop.f32.mrb[0].mxu0
    %1477 = vdwg.mxu0
    %v1478 = vld [vmem:[%s3] sm:$0xff]
    %v1479 = vld [vmem:[%s3 + $0x8] sm:$0xff]
    %v1480 = vld [vmem:[%s4] sm:$0x1]
    %v1482 = vlaneseq
    %v1483 = vshrl.u32 %v1482, 7
    %v1484 = vsub.s32 0, %v1483
    %v1485 = vrot.slane %v1480, %v1484
    %vm1487 = vcmask 130048
    %v1489 = vsel %vm1487, %v1475, 0
    %1491 = vmatprep.subr.mxu0 0.0
    %1492 = vmatpush1.msra.mxu0 %v1478
    %1493 = vmatprep.subr.mxu0 0.0
    %1494 = vmatpush1.msra.mxu0 %v1479
    %1495 = vmatprep.subr.mxu0 0.0
    %1496 = vmatpush1.msra.mxu0 0.0
    %1497 = vmatprep.subr.mxu0 0.0
    %1498 = vmatpush1.msra.mxu0 0.0
    %1499 = vmatprep.subr.mxu0 0.0
    %1500 = vmatpush1.msra.mxu0 0.0
    %1501 = vmatprep.subr.mxu0 0.0
    %1502 = vmatpush1.msra.mxu0 0.0
    %1503 = vmatprep.subr.mxu0 0.0
    %1504 = vmatpush1.msra.mxu0 0.0
    %1505 = vmatprep.subr.mxu0 0.0
    %1506 = vmatpush1.msra.mxu0 0.0
    %1507 = vmatprep.subr.mxu0 0.0
    %1508 = vmatpush1.msra.mxu0 0.0
    %1509 = vmatprep.subr.mxu0 0.0
    %1510 = vmatpush1.msra.mxu0 0.0
    %1511 = vmatprep.subr.mxu0 0.0
    %1512 = vmatpush1.msra.mxu0 0.0
    %1513 = vmatprep.subr.mxu0 0.0
    %1514 = vmatpush1.msra.mxu0 0.0
    %1515 = vmatprep.subr.mxu0 0.0
    %1516 = vmatpush1.msra.mxu0 0.0
    %1517 = vmatprep.subr.mxu0 0.0
    %1518 = vmatpush1.msra.mxu0 0.0
    %1519 = vmatprep.subr.mxu0 0.0
    %1520 = vmatpush1.msra.mxu0 0.0
    %1521 = vmatprep.subr.mxu0 0.0
    %1522 = vmatpush1.msra.mxu0 0.0
    %1523 = vmatprep.subr.mxu0 0.0
    %1524 = vmatpush1.msra.mxu0 0.0
    %1525 = vmatprep.subr.mxu0 0.0
    %1526 = vmatpush1.msra.mxu0 0.0
    %1527 = vmatprep.subr.mxu0 0.0
    %1528 = vmatpush1.msra.mxu0 0.0
    %1529 = vmatprep.subr.mxu0 0.0
    %1530 = vmatpush1.msra.mxu0 0.0
    %1531 = vmatprep.subr.mxu0 0.0
    %1532 = vmatpush1.msra.mxu0 0.0
    %1533 = vmatprep.subr.mxu0 0.0
    %1534 = vmatpush1.msra.mxu0 0.0
    %1535 = vmatprep.subr.mxu0 0.0
    %1536 = vmatpush1.msra.mxu0 0.0
    %1537 = vmatprep.subr.mxu0 0.0
    %1538 = vmatpush1.msra.mxu0 0.0
    %1539 = vmatprep.subr.mxu0 0.0
    %1540 = vmatpush1.msra.mxu0 0.0
    %1541 = vmatprep.subr.mxu0 0.0
    %1542 = vmatpush1.msra.mxu0 0.0
    %1543 = vmatprep.subr.mxu0 0.0
    %1544 = vmatpush1.msra.mxu0 0.0
    %1545 = vmatprep.subr.mxu0 0.0
    %1546 = vmatpush1.msra.mxu0 0.0
    %1547 = vmatprep.subr.mxu0 0.0
    %1548 = vmatpush1.msra.mxu0 0.0
    %1549 = vmatprep.subr.mxu0 0.0
    %1550 = vmatpush1.msra.mxu0 0.0
    %1551 = vmatprep.subr.mxu0 0.0
    %1552 = vmatpush1.msra.mxu0 0.0
    %1553 = vmatprep.subr.mxu0 0.0
    %1554 = vmatpush1.msra.mxu0 0.0
    %1555 = vmatprep.mubr.f32.mxu0 0.0
    %1556 = vmatmul.mubr.f32.gmra.mrb[0].mxu0 %v1489
    %v1557 = vpop.f32.mrb[0].mxu0
    %v1558 = vadd.f32 %v1485, %v1557
    %v1559 = vpop.f32.mrb[0].mxu0
    %1560 = vdwg.mxu0
    %v1561 = vsub.f32 0.0, %v1558
    %v1562 = vmul.f32 %v1561, 1.442695
    %v1563 = vpow.pop %v1562
    %v1564 = vadd.f32 %v1563, 1.0
    %v1565 = vrcp.pop %v1564
    %v1566 = vmul.f32 1.0, %v1565
    %vm1567 = vcmask 115712
    %1568 = vst.msk [vmem:[#allocation10] sm:$0x3] %vm1567, %v1566
    // Predicated region
    $region46: #{tpu_custom_call.1} parent=1 // pred_check
      _
    $region47: #{tpu_custom_call.1} parent=1 // pred_check_branch
      %1570 = sbr.rel (0) target = $region49
    $region48: #{tpu_custom_call.1} parent=1 // pred_region
      %s1572 = ssub.s32 32, 32
      %1573 = vsyncadd [#allocation9], %s1572
      %s1575 = sshll.u32 [#allocation10], 4
      %s1576 = int_to_ptr.vmem [resolvable:$true] %s1575
      %1578 = dma.vmem_to_hbm [thread:$0]  %s1576, 32, %s10, [#allocation9]
    $region49: #{tpu_custom_call.1} parent=1 // pred_fallthru
      _
    // Predicated region
    $region50: #{tpu_custom_call.1} parent=1 // pred_check
      _
    $region51: #{tpu_custom_call.1} parent=1 // pred_check_branch
      %1580 = sbr.rel (0) target = $region53
    $region52: #{tpu_custom_call.1} parent=1 // pred_region
      %1581 = dma.done [#allocation9], 32
    $region53: #{tpu_custom_call.1} parent=1 // pred_fallthru
      _
    %1582 = vsyncpa [#allocation8], 1
    %1583 = vsyncpa [#allocation9], 1

</llo_original>
